<compile_context>
chip_gen: v6e
topology: v6e:2x2x1
jax: 0.10.0
libtpu: 0.0.40
codegen_flags: <defaults>
</compile_context>

<pallas_src>
import functools
import math

import jax
import jax.numpy as jnp
import numpy as np
from jax.experimental import pallas as pl
from jax.experimental.pallas import tpu as pltpu

LN2 = math.log(2.0)


def motor_head_kernel(feat_ref, w1_ref, b1_ref, e_ref, et_ref, g_ref, w2bd_ref,
                      bias_ref, logt_ref, ev_ref,
                      logits_ref, partials_ref, *, inv_f):
    # final_layer: (tn, H) @ (H, T*F), bf16 in / f32 accumulate.
    ti = jnp.dot(feat_ref[...], w1_ref[...],
                 preferred_element_type=jnp.float32) + b1_ref[...]        # (tn, TF) f32

    # Per-(row, time-bin) RMSNorm without leaving the lane-dense (tn, TF) layout:
    # per-bin sum of squares via a bf16 MXU matmul with E (TF, TP) 0/1, rsqrt on
    # the EUP, then broadcast back across each F-group via E^T (TP, TF).
    sq = (ti * ti).astype(jnp.bfloat16)
    persum = jnp.dot(sq, e_ref[...], preferred_element_type=jnp.float32)  # (tn, TP)
    # 1 / max(sqrt(mean), 1e-12) == rsqrt(max(mean, 1e-24)).  Zero-padded lanes of
    # persum hit the eps branch; they multiply all-zero rows of E^T -> contribute 0.
    inv_small = jax.lax.rsqrt(jnp.maximum(persum * inv_f, 1e-24))
    inv_rms = jnp.dot(inv_small.astype(jnp.bfloat16), et_ref[...],
                      preferred_element_type=jnp.float32)                  # (tn, TF)
    normed = ti * inv_rms * g_ref[...]

    # task_layer as a block-diagonal matmul + fused (task + per-time-bin) bias.
    logits = jnp.dot(normed.astype(jnp.bfloat16), w2bd_ref[...],
                     preferred_element_type=jnp.float32) + bias_ref[...]   # (tn, TK)
    logits_ref[...] = logits

    # Per-tile loss partials: only a sublane reduction here, stored as two direct
    # row writes (no concatenate).  Cross-lane + cross-tile reduce in the wrapper.
    surv = jnp.sum(jnp.exp2(logits + logt_ref[...]), axis=0, keepdims=True)   # (1, TK)
    event = jnp.sum(ev_ref[...].astype(jnp.float32) * logits,
                    axis=0, keepdims=True)                                    # (1, TK)
    partials_ref[0, 0:1, :] = surv
    partials_ref[0, 1:2, :] = event


def motor_task_head(features, log_time, is_event, params, *,
                    num_time_bins, final_layer_size, num_tasks,
                    tile_n=256, weight_dtype=jnp.bfloat16):
    """Fused MOTORTaskHead forward: returns (loss, time_dependent_logits)."""
    N, H = features.shape
    T, F, K = num_time_bins, final_layer_size, num_tasks
    TF, TK = T * F, T * K
    TP = max(128, ((T + 127) // 128) * 128)          # lane-padded time-bin axis

    num_tiles = pl.cdiv(N, tile_n)
    Npad = num_tiles * tile_n
    pad = Npad - N

    # ---- parameter prep (pure layout plumbing; precompute once in real use) ----
    w1 = params["w1"].astype(weight_dtype)                                   # (H, TF)
    b1 = params["b1"].reshape(1, TF).astype(jnp.float32)                     # (1, TF)
    g_tiled = jnp.tile(params["g"].reshape(1, F), (1, T)).astype(jnp.float32)  # (1, TF)
    # T copies of w2 on the diagonal -> (TF, TK); replaces reshape + tiny matmul.
    # TODO(synk): for production-scale num_tasks do not materialize this dense —
    # add a TK grid axis (whole time bins per block) and stream (F, K) slices.
    w2_bd = jnp.kron(jnp.eye(T, dtype=jnp.float32),
                     params["w2"].astype(jnp.float32)).astype(weight_dtype)  # (TF, TK)
    # Fused output bias: tiled task bias + flattened per-time-bin bias.
    bias = (jnp.tile(params["b2"].reshape(1, K), (1, T)) +
            params["task_time_bias"].reshape(1, TK)).astype(jnp.float32)     # (1, TK)
    # Factored per-bin reduce/broadcast matrix: E[j, t] = (j // F == t), 0/1 exact in bf16.
    eye_tp = jnp.zeros((T, TP), jnp.float32).at[jnp.arange(T), jnp.arange(T)].set(1.0)
    e_mat = jnp.repeat(eye_tp, F, axis=0)                                    # (TF, TP)
    e_bf = e_mat.astype(weight_dtype)
    et_bf = e_mat.T.astype(weight_dtype)                                     # (TP, TF)

    # ---- input prep: bf16 streams, int8 mask, loss-neutral row padding ----
    feat = features.astype(jnp.bfloat16)
    logt2 = log_time.reshape(N, TK).astype(jnp.bfloat16)
    ev8 = is_event.reshape(N, TK).astype(jnp.int8)
    if pad:
        feat = jnp.pad(feat, ((0, pad), (0, 0)))
        # exp2(logits - 1e9) underflows to exactly 0 -> no survival contribution.
        logt2 = jnp.pad(logt2, ((0, pad), (0, 0)), constant_values=-1e9)
        ev8 = jnp.pad(ev8, ((0, pad), (0, 0)))

    # ---- generation-aware VMEM limit from the actual block footprint ----
    const_bytes = (H * TF + 2 * TF * TP + TF * TK) * 2 + (TF + TF + TK) * 4
    step_bytes = tile_n * (H * 2 + TK * (2 + 1 + 4)) + 2 * TK * 4
    footprint = const_bytes + 2 * step_bytes      # grid-varying blocks double-buffer
    try:
        vmem_cap = getattr(pltpu.get_tpu_info(), "vmem_capacity_bytes",
                           64 * 1024 * 1024)
    except Exception:                              # off-TPU tracing fallback
        vmem_cap = 64 * 1024 * 1024
    vmem_limit = min(int(0.75 * vmem_cap), max(32 * 1024 * 1024, 8 * footprint))

    def const_spec(shape):
        # Constant-index weight blocks: single-buffered (no point double-buffering).
        return pl.BlockSpec(shape, lambda i: (0, 0), pipeline_mode=pl.Buffered(1))

    kernel = functools.partial(motor_head_kernel, inv_f=1.0 / F)

    logits2, partials = pl.pallas_call(
        kernel,
        grid=(num_tiles,),
        in_specs=[
            pl.BlockSpec((tile_n, H), lambda i: (i, 0)),       # features (bf16)
            const_spec((H, TF)),                               # final_layer W (bf16)
            const_spec((1, TF)),                               # final_layer b
            const_spec((TF, TP)),                              # E   (bf16, 0/1)
            const_spec((TP, TF)),                              # E^T (bf16, 0/1)
            const_spec((1, TF)),                               # rmsnorm gain (tiled)
            const_spec((TF, TK)),                              # task W block-diag (bf16)
            const_spec((1, TK)),                               # fused output bias
            pl.BlockSpec((tile_n, TK), lambda i: (i, 0)),      # log_time (bf16)
            pl.BlockSpec((tile_n, TK), lambda i: (i, 0)),      # is_event (int8)
        ],
        out_specs=[
            pl.BlockSpec((tile_n, TK), lambda i: (i, 0)),      # logits (lane-dense)
            pl.BlockSpec((1, 2, TK), lambda i: (i, 0, 0)),     # [surv, event] lane sums
        ],
        out_shape=[
            jax.ShapeDtypeStruct((Npad, TK), jnp.float32),
            jax.ShapeDtypeStruct((num_tiles, 2, TK), jnp.float32),
        ],
        compiler_params=pltpu.CompilerParams(
            dimension_semantics=("parallel",),                 # no cross-step state
            vmem_limit_bytes=vmem_limit),
    )(feat, w1, b1, e_bf, et_bf, g_tiled, w2_bd, bias, logt2, ev8)

    n_elem = N * TK                                            # TRUE element count
    survival_loss = jnp.sum(partials[:, 0, :]) / n_elem
    event_loss = -LN2 * jnp.sum(partials[:, 1, :]) / n_elem
    loss = survival_loss + event_loss
    return loss, logits2[:N].reshape(N, T, K)


def reference(features, log_time, is_event, params, *, T, F, K):
    """Plain-JAX mirror of the PyTorch forward (f32 everywhere)."""
    N = features.shape[0]
    ti = features @ params["w1"] + params["b1"]
    ti = ti.reshape(N, T, F)
    rms = jnp.sqrt(jnp.mean(ti * ti, axis=-1, keepdims=True))
    normed = ti / jnp.maximum(rms, 1e-12) * params["g"]
    logits = normed @ params["w2"] + params["b2"] + params["task_time_bias"]
    survival_loss = jnp.mean(jnp.exp2(logits + log_time))
    event_loss = -LN2 * jnp.mean(jnp.where(is_event, logits, 0.0))
    return survival_loss + event_loss, logits


if __name__ == "__main__":
    # Small MOTORTaskHead configuration (T*K = 128 lanes -> fully lane-dense).
    hidden_size = 32          # H
    num_time_bins = 8         # T  (len(time_bins) == 9)
    final_layer_size = 32     # F
    num_tasks = 16            # K
    batch = 1000              # N (not a multiple of tile_n -> exercises padding/masking)
    tile_n = 256              # >= 256 fills the v6e/v7x MXU; 4 grid steps here

    key = jax.random.PRNGKey(0)
    k_feat, k_w1, k_w2, k_g, k_tb, k_lt, k_ev = jax.random.split(key, 7)

    # Deterministic synthetic parameters (shapes per the module's __init__,
    # linear weights stored pre-transposed as (in, out)).
    pretraining_rates = jnp.linspace(0.001, 0.1, num_tasks, dtype=jnp.float32)
    params = {
        "w1": jax.random.normal(k_w1, (hidden_size, num_time_bins * final_layer_size),
                                jnp.float32) / math.sqrt(hidden_size),
        "b1": jnp.zeros((num_time_bins * final_layer_size,), jnp.float32),
        "g": 1.0 + 0.1 * jax.random.normal(k_g, (final_layer_size,), jnp.float32),
        "w2": jax.random.normal(k_w2, (final_layer_size, num_tasks),
                                jnp.float32) / math.sqrt(final_layer_size),
        # task_layer.bias.data = log2(task rates)
        "b2": jnp.log2(pretraining_rates),
        # module initializes this to zeros; use small values to exercise the add
        "task_time_bias": 0.01 * jax.random.normal(
            k_tb, (1, num_time_bins, num_tasks), jnp.float32),
    }

    # Inputs: features + batch dict contents.
    features = jax.random.normal(k_feat, (batch, hidden_size), jnp.float32)
    log_time = jax.random.normal(k_lt, (batch, num_time_bins, num_tasks), jnp.float32)
    is_event = jax.random.bernoulli(k_ev, 0.1, (batch, num_time_bins, num_tasks))

    loss, logits = motor_task_head(
        features, log_time, is_event, params,
        num_time_bins=num_time_bins, final_layer_size=final_layer_size,
        num_tasks=num_tasks, tile_n=tile_n)
    jax.block_until_ready((loss, logits))

    ref_loss, ref_logits = reference(
        features, log_time, is_event, params,
        T=num_time_bins, F=final_layer_size, K=num_tasks)

    np.testing.assert_allclose(np.asarray(logits), np.asarray(ref_logits),
                               rtol=2e-2, atol=2e-2)
    np.testing.assert_allclose(np.asarray(loss), np.asarray(ref_loss),
                               rtol=2e-2, atol=2e-2)

    # TODO(synk): the module's `stats()` debug printer and the return_logits=False
    # path (returning None) are not reproduced; the kernel always emits logits.
    print("KERNEL_OK")
</pallas_src>

<mosaic_0001>
module attributes {stable_mosaic.version = 11 : i64} {
  func.func @motor_head_kernel(%arg0: i32, %arg1: memref<256x32xbf16, #tpu.memory_space<vmem>>, %arg2: memref<32x256xbf16, #tpu.memory_space<vmem>>, %arg3: memref<1x256xf32, #tpu.memory_space<vmem>>, %arg4: memref<256x128xbf16, #tpu.memory_space<vmem>>, %arg5: memref<128x256xbf16, #tpu.memory_space<vmem>>, %arg6: memref<1x256xf32, #tpu.memory_space<vmem>>, %arg7: memref<256x128xbf16, #tpu.memory_space<vmem>>, %arg8: memref<1x128xf32, #tpu.memory_space<vmem>>, %arg9: memref<256x128xbf16, #tpu.memory_space<vmem>>, %arg10: memref<256x128xi8, #tpu.memory_space<vmem>>, %arg11: memref<256x128xf32, #tpu.memory_space<vmem>>, %arg12: memref<1x2x128xf32, #tpu.memory_space<vmem>>) attributes {dimension_semantics = [#tpu.dimension_semantics<parallel>], iteration_bounds = array<i64: 4>, scalar_prefetch = 0 : i64, scratch_operands = 0 : i64, tpu.core_type = #tpu.core_type<tc>, window_params = [{transform_indices = @transform_0, window_bounds = array<i64: 256, 32>}, {pipeline_mode = #tpu.pipeline_mode<synchronous>, transform_indices = @transform_1, window_bounds = array<i64: 32, 256>}, {pipeline_mode = #tpu.pipeline_mode<synchronous>, transform_indices = @transform_2, window_bounds = array<i64: 1, 256>}, {pipeline_mode = #tpu.pipeline_mode<synchronous>, transform_indices = @transform_3, window_bounds = array<i64: 256, 128>}, {pipeline_mode = #tpu.pipeline_mode<synchronous>, transform_indices = @transform_4, window_bounds = array<i64: 128, 256>}, {pipeline_mode = #tpu.pipeline_mode<synchronous>, transform_indices = @transform_5, window_bounds = array<i64: 1, 256>}, {pipeline_mode = #tpu.pipeline_mode<synchronous>, transform_indices = @transform_6, window_bounds = array<i64: 256, 128>}, {pipeline_mode = #tpu.pipeline_mode<synchronous>, transform_indices = @transform_7, window_bounds = array<i64: 1, 128>}, {transform_indices = @transform_8, window_bounds = array<i64: 256, 128>}, {transform_indices = @transform_9, window_bounds = array<i64: 256, 128>}, {transform_indices = @transform_10, window_bounds = array<i64: 256, 128>}, {transform_indices = @transform_11, window_bounds = array<i64: 1, 2, 128>}]} {
    %c0 = arith.constant 0 : index
    %c0_0 = arith.constant 0 : index
    %0 = vector.load %arg1[%c0, %c0_0] : memref<256x32xbf16, #tpu.memory_space<vmem>>, vector<256x32xbf16>
    %c0_1 = arith.constant 0 : index
    %c0_2 = arith.constant 0 : index
    %1 = vector.load %arg2[%c0_1, %c0_2] : memref<32x256xbf16, #tpu.memory_space<vmem>>, vector<32x256xbf16>
    %cst = arith.constant dense<0.000000e+00> : vector<256x256xf32>
    %2 = tpu.matmul %0, %1, %cst {dimension_numbers = #tpu.dot_dimension_numbers<[1], [0], [0], [1], [0, 0, 1, 1], [], []>} : vector<256x32xbf16>, vector<32x256xbf16>, vector<256x256xf32> -> vector<256x256xf32>
    %c0_3 = arith.constant 0 : index
    %c0_4 = arith.constant 0 : index
    %3 = vector.load %arg3[%c0_3, %c0_4] : memref<1x256xf32, #tpu.memory_space<vmem>>, vector<1x256xf32>
    %4 = vector.broadcast %3 : vector<1x256xf32> to vector<256x256xf32>
    %5 = arith.addf %2, %4 : vector<256x256xf32>
    %6 = arith.mulf %5, %5 : vector<256x256xf32>
    %7 = arith.truncf %6 : vector<256x256xf32> to vector<256x256xbf16>
    %c0_5 = arith.constant 0 : index
    %c0_6 = arith.constant 0 : index
    %8 = vector.load %arg4[%c0_5, %c0_6] : memref<256x128xbf16, #tpu.memory_space<vmem>>, vector<256x128xbf16>
    %cst_7 = arith.constant dense<0.000000e+00> : vector<256x128xf32>
    %9 = tpu.matmul %7, %8, %cst_7 {dimension_numbers = #tpu.dot_dimension_numbers<[1], [0], [0], [1], [0, 0, 1, 1], [], []>} : vector<256x256xbf16>, vector<256x128xbf16>, vector<256x128xf32> -> vector<256x128xf32>
    %cst_8 = arith.constant 3.125000e-02 : f32
    %10 = vector.broadcast %cst_8 : f32 to vector<256x128xf32>
    %11 = arith.mulf %9, %10 : vector<256x128xf32>
    %cst_9 = arith.constant 1.000000e-24 : f32
    %12 = vector.broadcast %cst_9 : f32 to vector<256x128xf32>
    %13 = arith.maximumf %11, %12 : vector<256x128xf32>
    %14 = math.rsqrt %13 : vector<256x128xf32>
    %15 = arith.truncf %14 : vector<256x128xf32> to vector<256x128xbf16>
    %c0_10 = arith.constant 0 : index
    %c0_11 = arith.constant 0 : index
    %16 = vector.load %arg5[%c0_10, %c0_11] : memref<128x256xbf16, #tpu.memory_space<vmem>>, vector<128x256xbf16>
    %cst_12 = arith.constant dense<0.000000e+00> : vector<256x256xf32>
    %17 = tpu.matmul %15, %16, %cst_12 {dimension_numbers = #tpu.dot_dimension_numbers<[1], [0], [0], [1], [0, 0, 1, 1], [], []>} : vector<256x128xbf16>, vector<128x256xbf16>, vector<256x256xf32> -> vector<256x256xf32>
    %18 = arith.mulf %5, %17 : vector<256x256xf32>
    %c0_13 = arith.constant 0 : index
    %c0_14 = arith.constant 0 : index
    %19 = vector.load %arg6[%c0_13, %c0_14] : memref<1x256xf32, #tpu.memory_space<vmem>>, vector<1x256xf32>
    %20 = vector.broadcast %19 : vector<1x256xf32> to vector<256x256xf32>
    %21 = arith.mulf %18, %20 : vector<256x256xf32>
    %22 = arith.truncf %21 : vector<256x256xf32> to vector<256x256xbf16>
    %c0_15 = arith.constant 0 : index
    %c0_16 = arith.constant 0 : index
    %23 = vector.load %arg7[%c0_15, %c0_16] : memref<256x128xbf16, #tpu.memory_space<vmem>>, vector<256x128xbf16>
    %cst_17 = arith.constant dense<0.000000e+00> : vector<256x128xf32>
    %24 = tpu.matmul %22, %23, %cst_17 {dimension_numbers = #tpu.dot_dimension_numbers<[1], [0], [0], [1], [0, 0, 1, 1], [], []>} : vector<256x256xbf16>, vector<256x128xbf16>, vector<256x128xf32> -> vector<256x128xf32>
    %c0_18 = arith.constant 0 : index
    %c0_19 = arith.constant 0 : index
    %25 = vector.load %arg8[%c0_18, %c0_19] : memref<1x128xf32, #tpu.memory_space<vmem>>, vector<1x128xf32>
    %26 = vector.broadcast %25 : vector<1x128xf32> to vector<256x128xf32>
    %27 = arith.addf %24, %26 : vector<256x128xf32>
    %c0_20 = arith.constant 0 : index
    %c0_21 = arith.constant 0 : index
    %28 = vector.load %arg11[%c0_20, %c0_21] : memref<256x128xf32, #tpu.memory_space<vmem>>, vector<256x128xf32>
    tpu.vector_store %arg11[%c0_20, %c0_21], %27 {strides = array<i32>} : memref<256x128xf32, #tpu.memory_space<vmem>>, vector<256x128xf32>,
    %c0_22 = arith.constant 0 : index
    %c0_23 = arith.constant 0 : index
    %29 = vector.load %arg9[%c0_22, %c0_23] : memref<256x128xbf16, #tpu.memory_space<vmem>>, vector<256x128xbf16>
    %30 = arith.extf %29 : vector<256x128xbf16> to vector<256x128xf32>
    %31 = arith.addf %27, %30 : vector<256x128xf32>
    %32 = math.exp2 %31 : vector<256x128xf32>
    %cst_24 = arith.constant dense<0.000000e+00> : vector<128xf32>
    %33 = vector.multi_reduction <add>, %32, %cst_24 [0] : vector<256x128xf32> to vector<128xf32>
    %34 = vector.shape_cast %33 : vector<128xf32> to vector<1x128xf32>
    %c0_25 = arith.constant 0 : index
    %c0_26 = arith.constant 0 : index
    %35 = vector.load %arg10[%c0_25, %c0_26] : memref<256x128xi8, #tpu.memory_space<vmem>>, vector<256x128xi8>
    %36 = arith.sitofp %35 : vector<256x128xi8> to vector<256x128xf32>
    %37 = arith.mulf %36, %27 : vector<256x128xf32>
    %cst_27 = arith.constant dense<0.000000e+00> : vector<128xf32>
    %38 = vector.multi_reduction <add>, %37, %cst_27 [0] : vector<256x128xf32> to vector<128xf32>
    %39 = vector.shape_cast %38 : vector<128xf32> to vector<1x128xf32>
    %c0_28 = arith.constant 0 : index
    %c0_29 = arith.constant 0 : index
    %c0_30 = arith.constant 0 : index
    %40 = vector.load %arg12[%c0_28, %c0_29, %c0_30] : memref<1x2x128xf32, #tpu.memory_space<vmem>>, vector<1x1x128xf32>
    %41 = vector.shape_cast %40 : vector<1x1x128xf32> to vector<1x128xf32>
    %42 = vector.shape_cast %34 : vector<1x128xf32> to vector<1x1x128xf32>
    tpu.vector_store %arg12[%c0_28, %c0_29, %c0_30], %42 {strides = array<i32>} : memref<1x2x128xf32, #tpu.memory_space<vmem>>, vector<1x1x128xf32>,
    %c0_31 = arith.constant 0 : index
    %c1 = arith.constant 1 : index
    %c0_32 = arith.constant 0 : index
    %43 = vector.load %arg12[%c0_31, %c1, %c0_32] : memref<1x2x128xf32, #tpu.memory_space<vmem>>, vector<1x1x128xf32>
    %44 = vector.shape_cast %43 : vector<1x1x128xf32> to vector<1x128xf32>
    %45 = vector.shape_cast %39 : vector<1x128xf32> to vector<1x1x128xf32>
    tpu.vector_store %arg12[%c0_31, %c1, %c0_32], %45 {strides = array<i32>} : memref<1x2x128xf32, #tpu.memory_space<vmem>>, vector<1x1x128xf32>,
    return
  }
  func.func @transform_0(%arg0: i32) -> (i32, i32) {
    %c0_i32 = arith.constant 0 : i32
    %c0_i32_0 = arith.constant 0 : i32
    return %arg0, %c0_i32 : i32, i32
  }
  func.func @transform_1(%arg0: i32) -> (i32, i32) {
    %c0_i32 = arith.constant 0 : i32
    %c0_i32_0 = arith.constant 0 : i32
    %c0_i32_1 = arith.constant 0 : i32
    return %c0_i32, %c0_i32_0 : i32, i32
  }
  func.func @transform_2(%arg0: i32) -> (i32, i32) {
    %c0_i32 = arith.constant 0 : i32
    %c0_i32_0 = arith.constant 0 : i32
    %c0_i32_1 = arith.constant 0 : i32
    return %c0_i32, %c0_i32_0 : i32, i32
  }
  func.func @transform_3(%arg0: i32) -> (i32, i32) {
    %c0_i32 = arith.constant 0 : i32
    %c0_i32_0 = arith.constant 0 : i32
    %c0_i32_1 = arith.constant 0 : i32
    return %c0_i32, %c0_i32_0 : i32, i32
  }
  func.func @transform_4(%arg0: i32) -> (i32, i32) {
    %c0_i32 = arith.constant 0 : i32
    %c0_i32_0 = arith.constant 0 : i32
    %c0_i32_1 = arith.constant 0 : i32
    return %c0_i32, %c0_i32_0 : i32, i32
  }
  func.func @transform_5(%arg0: i32) -> (i32, i32) {
    %c0_i32 = arith.constant 0 : i32
    %c0_i32_0 = arith.constant 0 : i32
    %c0_i32_1 = arith.constant 0 : i32
    return %c0_i32, %c0_i32_0 : i32, i32
  }
  func.func @transform_6(%arg0: i32) -> (i32, i32) {
    %c0_i32 = arith.constant 0 : i32
    %c0_i32_0 = arith.constant 0 : i32
    %c0_i32_1 = arith.constant 0 : i32
    return %c0_i32, %c0_i32_0 : i32, i32
  }
  func.func @transform_7(%arg0: i32) -> (i32, i32) {
    %c0_i32 = arith.constant 0 : i32
    %c0_i32_0 = arith.constant 0 : i32
    %c0_i32_1 = arith.constant 0 : i32
    return %c0_i32, %c0_i32_0 : i32, i32
  }
  func.func @transform_8(%arg0: i32) -> (i32, i32) {
    %c0_i32 = arith.constant 0 : i32
    %c0_i32_0 = arith.constant 0 : i32
    return %arg0, %c0_i32 : i32, i32
  }
  func.func @transform_9(%arg0: i32) -> (i32, i32) {
    %c0_i32 = arith.constant 0 : i32
    %c0_i32_0 = arith.constant 0 : i32
    return %arg0, %c0_i32 : i32, i32
  }
  func.func @transform_10(%arg0: i32) -> (i32, i32) {
    %c0_i32 = arith.constant 0 : i32
    %c0_i32_0 = arith.constant 0 : i32
    return %arg0, %c0_i32 : i32, i32
  }
  func.func @transform_11(%arg0: i32) -> (i32, i32, i32) {
    %c0_i32 = arith.constant 0 : i32
    %c0_i32_0 = arith.constant 0 : i32
    %c0_i32_1 = arith.constant 0 : i32
    return %arg0, %c0_i32, %c0_i32_0 : i32, i32, i32
  }
}

</mosaic_0001>

<llo_original>
// kernel: tpu_custom_call.1
$region0: #{tpu_custom_call.1}
  #allocation0 [shape = 'u32[]', space=smem, size = 0x4, offset = 0x4, fixed_abs, tag = 'smem constant byte address 0x4 - core index']
  #allocation1 [shape = 'u32[144,128]{1,0:T(1,128)}', space=vmem, size = 0x12000, scoped, tag = 'internal scratch']
  %s0 = inlined_call_operand.vmem [shape: bf16[1024,32], index: 0, kind: input, shape index: {}]
  %s1 = inlined_call_operand.hbm [shape: bf16[32,256], index: 1, kind: input, shape index: {}]
  %s2 = inlined_call_operand.vmem [shape: f32[1,256], index: 2, kind: input, shape index: {}]
  %s3 = inlined_call_operand.vmem [shape: bf16[256,128], index: 3, kind: input, shape index: {}]
  %s4 = inlined_call_operand.hbm [shape: bf16[128,256], index: 4, kind: input, shape index: {}]
  %s5 = inlined_call_operand.vmem [shape: f32[1,256], index: 5, kind: input, shape index: {}]
  %s6 = inlined_call_operand.hbm [shape: bf16[256,128], index: 6, kind: input, shape index: {}]
  %s7 = inlined_call_operand.vmem [shape: f32[1,128], index: 7, kind: input, shape index: {}]
  %s8 = inlined_call_operand.vmem [shape: bf16[1024,128], index: 8, kind: input, shape index: {}]
  %s9 = inlined_call_operand.hbm [shape: s8[1024,128], index: 9, kind: input, shape index: {}]
  %s10 = inlined_call_operand.hbm [shape: f32[1024,128], index: 10, kind: output, shape index: {0}]
  %s11 = inlined_call_operand.hbm [shape: f32[4,2,128], index: 11, kind: output, shape index: {1}]
  %12 = xla_tuple %s10, %s11
  %s13 = sld [smem:[#allocation0]]
  $region97: #{tpu_custom_call.1} parent=0
    _
  %s15 = ssub.s32 1, %s13
  %s16 = scalar_select 0, %s15, %s13
  $region1: #{tpu_custom_call.1} parent=0
    #allocation2 [shape = 'u8[16384]{0}', space=vmem, size = 0x4000, scoped, tag = 'input window, operand 1, single buffered']
    #allocation3 [shape = 's32[2]{0}', space=sflag, size = 0x8, scoped, tag = 'scoped memory for tpu_custom_call.1']
    #allocation4 [shape = 's32[2]{0}', space=sflag, size = 0x8, scoped, tag = 'scoped memory for tpu_custom_call.1']
    #allocation5 [shape = 'u8[65536]{0}', space=vmem, size = 0x10000, scoped, tag = 'input window, operand 4, single buffered']
    #allocation6 [shape = 's32[1]{0}', space=sflag, size = 0x4, scoped, tag = 'scoped memory for tpu_custom_call.1']
    #allocation7 [shape = 'u8[65536]{0}', space=vmem, size = 0x10000, scoped, tag = 'input window, operand 6, single buffered']
    #allocation8 [shape = 'u8[65536]{0}', space=vmem, size = 0x10000, scoped, tag = 'input window, operand 9']
    #allocation9 [shape = 's32[2]{0}', space=sflag, size = 0x8, scoped, tag = 'scoped memory for tpu_custom_call.1']
    #allocation10 [shape = 'u8[262144]{0}', space=vmem, size = 0x40000, scoped, tag = 'output window, operand 0']
    #allocation11 [shape = 'u8[2048]{0}', space=vmem, size = 0x800, scoped, tag = 'output window, operand 1']
    #allocation12 [shape = 's32[2]{0}', space=sflag, size = 0x8, scoped, tag = 'scoped memory for tpu_custom_call.1']
    %17 = vsyncpa [#allocation3], 0
    %18 = vsyncpa [#allocation6], 0
    %19 = vsyncpa [#allocation9], 0
    %s20 = scalar_lea.sflag [#allocation9], 1
    %21 = vsyncpa %s20, 0
    %22 = vsyncpa [#allocation4], 0
    %s23 = scalar_lea.sflag [#allocation4], 1
    %24 = vsyncpa %s23, 0
    %25 = vsyncpa [#allocation12], 0
    %s26 = scalar_lea.sflag [#allocation12], 1
    %27 = vsyncpa %s26, 0
    loop: start=0, step=1, limit=6
    $region2: #{tpu_custom_call.1} parent=1 // loop_pre_header
      _
    $region3: #{tpu_custom_call.1} parent=1 // loop_header
      %s29 = sphi 0, %s33
      %p30 = scmp.ge.s32.totalorder %s29, 6
      %s39 = sphi 0, %s41
      %s42 = sphi 0, %s39
      %s43 = sphi 0, %s42
      %s59 = sphi 0, %s43
      %s63 = sphi 0, %s63
      %s65 = sphi 0, %s63
      %s66 = sphi 0, %s65
      %s80 = sphi 0, %s66
      %s84 = sphi 0, %s84
      %s86 = sphi 0, %s84
      %s87 = sphi 0, %s86
      %s101 = sphi 0, %s87
      %s105 = sphi 0, %s105
      %s107 = sphi 0, %s105
      %s108 = sphi 0, %s107
      %s122 = sphi 0, %s108
      %s126 = sphi 0, %s126
      %s128 = sphi 0, %s126
      %s129 = sphi 0, %s128
      %s143 = sphi 0, %s129
      %s147 = sphi 0, %s147
      %s149 = sphi 0, %s147
      %s150 = sphi 0, %s149
      %s164 = sphi 0, %s150
      %s168 = sphi 0, %s168
      %s170 = sphi 0, %s168
      %s171 = sphi 0, %s170
      %s185 = sphi 0, %s171
      %s189 = sphi 0, %s189
      %s191 = sphi 0, %s189
      %s192 = sphi 0, %s191
      %s206 = sphi 0, %s192
      %s212 = sphi 0, %s214
      %s215 = sphi 0, %s212
      %s216 = sphi 0, %s215
      %s232 = sphi 0, %s216
      %s238 = sphi 0, %s240
      %s241 = sphi 0, %s238
      %s242 = sphi 0, %s241
      %s258 = sphi 0, %s242
      %s264 = sphi 0, %s266
      %s267 = sphi 0, %s264
      %s268 = sphi 0, %s267
      %s284 = sphi 0, %s268
      %s290 = sphi 0, %s292
      %s293 = sphi 0, %s290
      %s294 = sphi 0, %s293
      %s310 = sphi 0, %s294
    $region4: #{tpu_custom_call.1} parent=1 // loop_header_branch
      %32 = sbr.rel (%p30) target = $region8
    $region5: #{tpu_custom_call.1} parent=1 // loop_body
      %s34 = ssub.s32 %s29, 1
      %s35 = ssub.s32 %s29, 2
      %s36 = sadd.s32 %s29, 1
      %s37 = ssub.s32 %s29, %s36
      %p38 = scmp.eq.s32.totalorder %s37, 0
      %s40 = sadd.s32 %s39, 1
      %s41 = scalar_select %p38, %s39, %s40
      %p44 = pneg %p38
      %p45 = scmp.eq.s32.totalorder %s29, 3
      %p46 = por %p44, %p45
      %p47 = scmp.ne.s32.totalorder %s39, %s42
      %p48 = scmp.eq.s32.totalorder %s29, 0
      %p49 = por %p47, %p48
      %p50 = scmp.ne.s32.totalorder %s39, %s42
      %p51 = scmp.eq.s32.totalorder %s34, 3
      %p52 = por %p50, %p51
      %p53 = scmp.ne.s32.totalorder %s42, %s43
      %p54 = scmp.eq.s32.totalorder %s34, 0
      %p55 = por %p53, %p54
      %p56 = scmp.ne.s32.totalorder %s42, %s43
      %p57 = scmp.eq.s32.totalorder %s35, 3
      %p58 = por %p56, %p57
      %p60 = scmp.ne.s32.totalorder %s43, %s59
      %p61 = scmp.eq.s32.totalorder %s35, 0
      %p62 = por %p60, %p61
      %s64 = sadd.s32 %s63, 1
      %p67 = scmp.eq.s32.totalorder %s29, 3
      %p68 = scmp.ne.s32.totalorder %s63, %s65
      %p69 = scmp.eq.s32.totalorder %s29, 0
      %p70 = por %p68, %p69
      %p71 = scmp.ne.s32.totalorder %s63, %s65
      %p72 = scmp.eq.s32.totalorder %s34, 3
      %p73 = por %p71, %p72
      %p74 = scmp.ne.s32.totalorder %s65, %s66
      %p75 = scmp.eq.s32.totalorder %s34, 0
      %p76 = por %p74, %p75
      %p77 = scmp.ne.s32.totalorder %s65, %s66
      %p78 = scmp.eq.s32.totalorder %s35, 3
      %p79 = por %p77, %p78
      %p81 = scmp.ne.s32.totalorder %s66, %s80
      %p82 = scmp.eq.s32.totalorder %s35, 0
      %p83 = por %p81, %p82
      %s85 = sadd.s32 %s84, 1
      %p88 = scmp.eq.s32.totalorder %s29, 3
      %p89 = scmp.ne.s32.totalorder %s84, %s86
      %p90 = scmp.eq.s32.totalorder %s29, 0
      %p91 = por %p89, %p90
      %p92 = scmp.ne.s32.totalorder %s84, %s86
      %p93 = scmp.eq.s32.totalorder %s34, 3
      %p94 = por %p92, %p93
      %p95 = scmp.ne.s32.totalorder %s86, %s87
      %p96 = scmp.eq.s32.totalorder %s34, 0
      %p97 = por %p95, %p96
      %p98 = scmp.ne.s32.totalorder %s86, %s87
      %p99 = scmp.eq.s32.totalorder %s35, 3
      %p100 = por %p98, %p99
      %p102 = scmp.ne.s32.totalorder %s87, %s101
      %p103 = scmp.eq.s32.totalorder %s35, 0
      %p104 = por %p102, %p103
      %s106 = sadd.s32 %s105, 1
      %p109 = scmp.eq.s32.totalorder %s29, 3
      %p110 = scmp.ne.s32.totalorder %s105, %s107
      %p111 = scmp.eq.s32.totalorder %s29, 0
      %p112 = por %p110, %p111
      %p113 = scmp.ne.s32.totalorder %s105, %s107
      %p114 = scmp.eq.s32.totalorder %s34, 3
      %p115 = por %p113, %p114
      %p116 = scmp.ne.s32.totalorder %s107, %s108
      %p117 = scmp.eq.s32.totalorder %s34, 0
      %p118 = por %p116, %p117
      %p119 = scmp.ne.s32.totalorder %s107, %s108
      %p120 = scmp.eq.s32.totalorder %s35, 3
      %p121 = por %p119, %p120
      %p123 = scmp.ne.s32.totalorder %s108, %s122
      %p124 = scmp.eq.s32.totalorder %s35, 0
      %p125 = por %p123, %p124
      %s127 = sadd.s32 %s126, 1
      %p130 = scmp.eq.s32.totalorder %s29, 3
      %p131 = scmp.ne.s32.totalorder %s126, %s128
      %p132 = scmp.eq.s32.totalorder %s29, 0
      %p133 = por %p131, %p132
      %p134 = scmp.ne.s32.totalorder %s126, %s128
      %p135 = scmp.eq.s32.totalorder %s34, 3
      %p136 = por %p134, %p135
      %p137 = scmp.ne.s32.totalorder %s128, %s129
      %p138 = scmp.eq.s32.totalorder %s34, 0
      %p139 = por %p137, %p138
      %p140 = scmp.ne.s32.totalorder %s128, %s129
      %p141 = scmp.eq.s32.totalorder %s35, 3
      %p142 = por %p140, %p141
      %p144 = scmp.ne.s32.totalorder %s129, %s143
      %p145 = scmp.eq.s32.totalorder %s35, 0
      %p146 = por %p144, %p145
      %s148 = sadd.s32 %s147, 1
      %p151 = scmp.eq.s32.totalorder %s29, 3
      %p152 = scmp.ne.s32.totalorder %s147, %s149
      %p153 = scmp.eq.s32.totalorder %s29, 0
      %p154 = por %p152, %p153
      %p155 = scmp.ne.s32.totalorder %s147, %s149
      %p156 = scmp.eq.s32.totalorder %s34, 3
      %p157 = por %p155, %p156
      %p158 = scmp.ne.s32.totalorder %s149, %s150
      %p159 = scmp.eq.s32.totalorder %s34, 0
      %p160 = por %p158, %p159
      %p161 = scmp.ne.s32.totalorder %s149, %s150
      %p162 = scmp.eq.s32.totalorder %s35, 3
      %p163 = por %p161, %p162
      %p165 = scmp.ne.s32.totalorder %s150, %s164
      %p166 = scmp.eq.s32.totalorder %s35, 0
      %p167 = por %p165, %p166
      %s169 = sadd.s32 %s168, 1
      %p172 = scmp.eq.s32.totalorder %s29, 3
      %p173 = scmp.ne.s32.totalorder %s168, %s170
      %p174 = scmp.eq.s32.totalorder %s29, 0
      %p175 = por %p173, %p174
      %p176 = scmp.ne.s32.totalorder %s168, %s170
      %p177 = scmp.eq.s32.totalorder %s34, 3
      %p178 = por %p176, %p177
      %p179 = scmp.ne.s32.totalorder %s170, %s171
      %p180 = scmp.eq.s32.totalorder %s34, 0
      %p181 = por %p179, %p180
      %p182 = scmp.ne.s32.totalorder %s170, %s171
      %p183 = scmp.eq.s32.totalorder %s35, 3
      %p184 = por %p182, %p183
      %p186 = scmp.ne.s32.totalorder %s171, %s185
      %p187 = scmp.eq.s32.totalorder %s35, 0
      %p188 = por %p186, %p187
      %s190 = sadd.s32 %s189, 1
      %p193 = scmp.eq.s32.totalorder %s29, 3
      %p194 = scmp.ne.s32.totalorder %s189, %s191
      %p195 = scmp.eq.s32.totalorder %s29, 0
      %p196 = por %p194, %p195
      %p197 = scmp.ne.s32.totalorder %s189, %s191
      %p198 = scmp.eq.s32.totalorder %s34, 3
      %p199 = por %p197, %p198
      %p200 = scmp.ne.s32.totalorder %s191, %s192
      %p201 = scmp.eq.s32.totalorder %s34, 0
      %p202 = por %p200, %p201
      %p203 = scmp.ne.s32.totalorder %s191, %s192
      %p204 = scmp.eq.s32.totalorder %s35, 3
      %p205 = por %p203, %p204
      %p207 = scmp.ne.s32.totalorder %s192, %s206
      %p208 = scmp.eq.s32.totalorder %s35, 0
      %p209 = por %p207, %p208
      %s210 = ssub.s32 %s29, %s36
      %p211 = scmp.eq.s32.totalorder %s210, 0
      %s213 = sadd.s32 %s212, 1
      %s214 = scalar_select %p211, %s212, %s213
      %p217 = pneg %p211
      %p218 = scmp.eq.s32.totalorder %s29, 3
      %p219 = por %p217, %p218
      %p220 = scmp.ne.s32.totalorder %s212, %s215
      %p221 = scmp.eq.s32.totalorder %s29, 0
      %p222 = por %p220, %p221
      %p223 = scmp.ne.s32.totalorder %s212, %s215
      %p224 = scmp.eq.s32.totalorder %s34, 3
      %p225 = por %p223, %p224
      %p226 = scmp.ne.s32.totalorder %s215, %s216
      %p227 = scmp.eq.s32.totalorder %s34, 0
      %p228 = por %p226, %p227
      %p229 = scmp.ne.s32.totalorder %s215, %s216
      %p230 = scmp.eq.s32.totalorder %s35, 3
      %p231 = por %p229, %p230
      %p233 = scmp.ne.s32.totalorder %s216, %s232
      %p234 = scmp.eq.s32.totalorder %s35, 0
      %p235 = por %p233, %p234
      %s236 = ssub.s32 %s29, %s36
      %p237 = scmp.eq.s32.totalorder %s236, 0
      %s239 = sadd.s32 %s238, 1
      %s240 = scalar_select %p237, %s238, %s239
      %p243 = pneg %p237
      %p244 = scmp.eq.s32.totalorder %s29, 3
      %p245 = por %p243, %p244
      %p246 = scmp.ne.s32.totalorder %s238, %s241
      %p247 = scmp.eq.s32.totalorder %s29, 0
      %p248 = por %p246, %p247
      %p249 = scmp.ne.s32.totalorder %s238, %s241
      %p250 = scmp.eq.s32.totalorder %s34, 3
      %p251 = por %p249, %p250
      %p252 = scmp.ne.s32.totalorder %s241, %s242
      %p253 = scmp.eq.s32.totalorder %s34, 0
      %p254 = por %p252, %p253
      %p255 = scmp.ne.s32.totalorder %s241, %s242
      %p256 = scmp.eq.s32.totalorder %s35, 3
      %p257 = por %p255, %p256
      %p259 = scmp.ne.s32.totalorder %s242, %s258
      %p260 = scmp.eq.s32.totalorder %s35, 0
      %p261 = por %p259, %p260
      %s262 = ssub.s32 %s29, %s36
      %p263 = scmp.eq.s32.totalorder %s262, 0
      %s265 = sadd.s32 %s264, 1
      %s266 = scalar_select %p263, %s264, %s265
      %p269 = pneg %p263
      %p270 = scmp.eq.s32.totalorder %s29, 3
      %p271 = por %p269, %p270
      %p272 = scmp.ne.s32.totalorder %s264, %s267
      %p273 = scmp.eq.s32.totalorder %s29, 0
      %p274 = por %p272, %p273
      %p275 = scmp.ne.s32.totalorder %s264, %s267
      %p276 = scmp.eq.s32.totalorder %s34, 3
      %p277 = por %p275, %p276
      %p278 = scmp.ne.s32.totalorder %s267, %s268
      %p279 = scmp.eq.s32.totalorder %s34, 0
      %p280 = por %p278, %p279
      %p281 = scmp.ne.s32.totalorder %s267, %s268
      %p282 = scmp.eq.s32.totalorder %s35, 3
      %p283 = por %p281, %p282
      %p285 = scmp.ne.s32.totalorder %s268, %s284
      %p286 = scmp.eq.s32.totalorder %s35, 0
      %p287 = por %p285, %p286
      %s288 = ssub.s32 %s29, %s36
      %p289 = scmp.eq.s32.totalorder %s288, 0
      %s291 = sadd.s32 %s290, 1
      %s292 = scalar_select %p289, %s290, %s291
      %p295 = pneg %p289
      %p296 = scmp.eq.s32.totalorder %s29, 3
      %p297 = por %p295, %p296
      %p298 = scmp.ne.s32.totalorder %s290, %s293
      %p299 = scmp.eq.s32.totalorder %s29, 0
      %p300 = por %p298, %p299
      %p301 = scmp.ne.s32.totalorder %s290, %s293
      %p302 = scmp.eq.s32.totalorder %s34, 3
      %p303 = por %p301, %p302
      %p304 = scmp.ne.s32.totalorder %s293, %s294
      %p305 = scmp.eq.s32.totalorder %s34, 0
      %p306 = por %p304, %p305
      %p307 = scmp.ne.s32.totalorder %s293, %s294
      %p308 = scmp.eq.s32.totalorder %s35, 3
      %p309 = por %p307, %p308
      %p311 = scmp.ne.s32.totalorder %s294, %s310
      %p312 = scmp.eq.s32.totalorder %s35, 0
      %p313 = por %p311, %p312
      %p314 = scmp.le.s32.totalorder 1, %s29
      %p315 = scmp.lt.s32.totalorder %s29, 5
      %p316 = pnand %p314, %p315
      %p317 = pneg %p316
      // Predicated region
      $region9: #{tpu_custom_call.1} parent=5 // pred_check
        _
      $region10: #{tpu_custom_call.1} parent=5 // pred_check_branch
        %319 = sbr.rel (%p316) target = $region12
      $region11: #{tpu_custom_call.1} parent=5 // pred_region
        %s320 = ssub.s32 %s29, 1
        // Predicated region
        $region13: #{tpu_custom_call.1} parent=11 // pred_check
          %p321 = pneg %p76
        $region14: #{tpu_custom_call.1} parent=11 // pred_check_branch
          %323 = sbr.rel (%p321) target = $region16
        $region15: #{tpu_custom_call.1} parent=11 // pred_region
          %s325 = ssub.s32 512, 512
          %326 = vsyncadd [#allocation3], %s325
          %s327 = sshll.u32 [#allocation2], 4
          %s328 = int_to_ptr.vmem [resolvable:$true] %s327
          %333 = dma.hbm_to_vmem [thread:$0]  %s1, 512, %s328, [#allocation3], 128, 128, 8
        $region16: #{tpu_custom_call.1} parent=11 // pred_fallthru
          _
        // Predicated region
        $region17: #{tpu_custom_call.1} parent=11 // pred_check
          %p334 = pneg %p97
        $region18: #{tpu_custom_call.1} parent=11 // pred_check_branch
          %336 = sbr.rel (%p334) target = $region20
        $region19: #{tpu_custom_call.1} parent=11 // pred_region
          _
        $region20: #{tpu_custom_call.1} parent=11 // pred_fallthru
          _
        // Predicated region
        $region21: #{tpu_custom_call.1} parent=11 // pred_check
          %p337 = pneg %p118
        $region22: #{tpu_custom_call.1} parent=11 // pred_check_branch
          %339 = sbr.rel (%p337) target = $region24
        $region23: #{tpu_custom_call.1} parent=11 // pred_region
          _
        $region24: #{tpu_custom_call.1} parent=11 // pred_fallthru
          _
        // Predicated region
        $region25: #{tpu_custom_call.1} parent=11 // pred_check
          %p340 = pneg %p139
        $region26: #{tpu_custom_call.1} parent=11 // pred_check_branch
          %342 = sbr.rel (%p340) target = $region28
        $region27: #{tpu_custom_call.1} parent=11 // pred_region
          %s344 = ssub.s32 2048, 2048
          %345 = vsyncadd [#allocation6], %s344
          %s346 = sshll.u32 [#allocation5], 4
          %s347 = int_to_ptr.vmem [resolvable:$true] %s346
          %352 = dma.hbm_to_vmem [thread:$0]  %s4, 2048, %s347, [#allocation6], 128, 128, 8
        $region28: #{tpu_custom_call.1} parent=11 // pred_fallthru
          _
        // Predicated region
        $region29: #{tpu_custom_call.1} parent=11 // pred_check
          %p353 = pneg %p160
        $region30: #{tpu_custom_call.1} parent=11 // pred_check_branch
          %355 = sbr.rel (%p353) target = $region32
        $region31: #{tpu_custom_call.1} parent=11 // pred_region
          _
        $region32: #{tpu_custom_call.1} parent=11 // pred_fallthru
          _
        // Predicated region
        $region33: #{tpu_custom_call.1} parent=11 // pred_check
          %p356 = pneg %p181
        $region34: #{tpu_custom_call.1} parent=11 // pred_check_branch
          %358 = sbr.rel (%p356) target = $region36
        $region35: #{tpu_custom_call.1} parent=11 // pred_region
          %s360 = ssub.s32 2048, 2048
          %361 = vsyncadd [#allocation6], %s360
          %s362 = sshll.u32 [#allocation7], 4
          %s363 = int_to_ptr.vmem [resolvable:$true] %s362
          %368 = dma.hbm_to_vmem [thread:$0]  %s6, 2048, %s363, [#allocation6], 64, 64, 4
        $region36: #{tpu_custom_call.1} parent=11 // pred_fallthru
          _
        // Predicated region
        $region37: #{tpu_custom_call.1} parent=11 // pred_check
          %p369 = pneg %p202
        $region38: #{tpu_custom_call.1} parent=11 // pred_check_branch
          %371 = sbr.rel (%p369) target = $region40
        $region39: #{tpu_custom_call.1} parent=11 // pred_region
          _
        $region40: #{tpu_custom_call.1} parent=11 // pred_fallthru
          _
      $region12: #{tpu_custom_call.1} parent=5 // pred_fallthru
        _
      %p372 = scmp.lt.s32.totalorder %s29, 4
      // Predicated region
      $region41: #{tpu_custom_call.1} parent=5 // pred_check
        %p373 = pneg %p372
      $region42: #{tpu_custom_call.1} parent=5 // pred_check_branch
        %375 = sbr.rel (%p373) target = $region44
      $region43: #{tpu_custom_call.1} parent=5 // pred_region
        // Predicated region
        $region45: #{tpu_custom_call.1} parent=43 // pred_check
          %p376 = pneg %p49
        $region46: #{tpu_custom_call.1} parent=43 // pred_check_branch
          %378 = sbr.rel (%p376) target = $region48
        $region47: #{tpu_custom_call.1} parent=43 // pred_region
          %s379 = smul.u32 32, %s29
          %p380 = scmp.lt.s32.totalorder %s379, 127
          %s381 = scalar_select %p380, %s379, 127
          %s382 = smul.addr %s381, 4
          %s383 = scalar_lea.vmem %s0, %s382
          %s384 = smul.u32 32, %s29
        $region48: #{tpu_custom_call.1} parent=43 // pred_fallthru
          _
        // Predicated region
        $region49: #{tpu_custom_call.1} parent=43 // pred_check
          %p385 = pneg %p222
        $region50: #{tpu_custom_call.1} parent=43 // pred_check_branch
          %387 = sbr.rel (%p385) target = $region52
        $region51: #{tpu_custom_call.1} parent=43 // pred_region
          %s388 = smul.u32 32, %s29
          %p389 = scmp.lt.s32.totalorder %s388, 127
          %s390 = scalar_select %p389, %s388, 127
          %s391 = smul.addr %s390, 4
          %s392 = scalar_lea.vmem %s8, %s391
          %s393 = smul.u32 32, %s29
        $region52: #{tpu_custom_call.1} parent=43 // pred_fallthru
          _
        // Predicated region
        $region53: #{tpu_custom_call.1} parent=43 // pred_check
          %p394 = pneg %p248
        $region54: #{tpu_custom_call.1} parent=43 // pred_check_branch
          %396 = sbr.rel (%p394) target = $region56
        $region55: #{tpu_custom_call.1} parent=43 // pred_region
          %s397 = sand.u32 %s238, 1
          %s398 = scalar_lea.sflag [#allocation9], %s397
          %s399 = sand.u32 %s238, 1
          %s400 = smul.addr %s399, 64
          %s401 = scalar_lea.vmem [#allocation8], %s400
          %s402 = smul.u32 8, %s29
          %s404 = ssub.s32 1024, 1024
          %405 = vsyncadd %s398, %s404
          %s406 = smul.addr %s402, 128
          %s407 = scalar_lea.hbm %s9, %s406
          %s408 = sshll.u32 %s401, 4
          %s409 = int_to_ptr.vmem [resolvable:$true] %s408
          %414 = dma.hbm_to_vmem [thread:$0]  %s407, 1024, %s409, %s398, 128, 128, 8
        $region56: #{tpu_custom_call.1} parent=43 // pred_fallthru
          _
      $region44: #{tpu_custom_call.1} parent=5 // pred_fallthru
        _
      %p415 = scmp.le.s32.totalorder 1, %s29
      %p416 = scmp.lt.s32.totalorder %s29, 5
      %p417 = pnand %p415, %p416
      %p418 = pneg %p417
      // Predicated region
      $region57: #{tpu_custom_call.1} parent=5 // pred_check
        _
      $region58: #{tpu_custom_call.1} parent=5 // pred_check_branch
        %420 = sbr.rel (%p417) target = $region60
      $region59: #{tpu_custom_call.1} parent=5 // pred_region
        %s421 = ssub.s32 %s29, 1
        // Predicated region
        $region61: #{tpu_custom_call.1} parent=59 // pred_check
          %p422 = pneg %p76
        $region62: #{tpu_custom_call.1} parent=59 // pred_check_branch
          %424 = sbr.rel (%p422) target = $region64
        $region63: #{tpu_custom_call.1} parent=59 // pred_region
          %425 = dma.done [#allocation3], 512
        $region64: #{tpu_custom_call.1} parent=59 // pred_fallthru
          _
        // Predicated region
        $region65: #{tpu_custom_call.1} parent=59 // pred_check
          %p426 = pneg %p139
        $region66: #{tpu_custom_call.1} parent=59 // pred_check_branch
          %428 = sbr.rel (%p426) target = $region68
        $region67: #{tpu_custom_call.1} parent=59 // pred_region
          %429 = dma.done [#allocation6], 2048
        $region68: #{tpu_custom_call.1} parent=59 // pred_fallthru
          _
        // Predicated region
        $region69: #{tpu_custom_call.1} parent=59 // pred_check
          %p430 = pneg %p181
        $region70: #{tpu_custom_call.1} parent=59 // pred_check_branch
          %432 = sbr.rel (%p430) target = $region72
        $region71: #{tpu_custom_call.1} parent=59 // pred_region
          %433 = dma.done [#allocation6], 2048
        $region72: #{tpu_custom_call.1} parent=59 // pred_fallthru
          _
        %s434 = sand.u32 %s241, 1
        %s435 = scalar_lea.sflag [#allocation9], %s434
        %s436 = sand.u32 %s241, 1
        %s437 = smul.addr %s436, 64
        %s438 = scalar_lea.vmem [#allocation8], %s437
        // Predicated region
        $region73: #{tpu_custom_call.1} parent=59 // pred_check
          %p439 = pneg %p254
        $region74: #{tpu_custom_call.1} parent=59 // pred_check_branch
          %441 = sbr.rel (%p439) target = $region76
        $region75: #{tpu_custom_call.1} parent=59 // pred_region
          %442 = dma.done %s435, 1024
        $region76: #{tpu_custom_call.1} parent=59 // pred_fallthru
          _
        %s443 = smul.u32 32, %s34
        %p444 = scmp.lt.s32.totalorder %s443, 127
        %s445 = scalar_select %p444, %s443, 127
        %s446 = smul.addr %s445, 4
        %s447 = scalar_lea.vmem %s0, %s446
        %p448 = pneg %p55
        %p449 = pneg %p52
        %p450 = pneg %p76
        %p451 = pneg %p73
        %p452 = pneg %p97
        %p453 = pneg %p94
        %p454 = pneg %p118
        %p455 = pneg %p115
        %p456 = pneg %p139
        %p457 = pneg %p136
        %p458 = pneg %p160
        %p459 = pneg %p157
        %p460 = pneg %p181
        %p461 = pneg %p178
        %p462 = pneg %p202
        %p463 = pneg %p199
        %s464 = smul.u32 32, %s34
        %p465 = scmp.lt.s32.totalorder %s464, 127
        %s466 = scalar_select %p465, %s464, 127
        %s467 = smul.addr %s466, 4
        %s468 = scalar_lea.vmem %s8, %s467
        %p469 = pneg %p228
        %p470 = pneg %p225
        %s471 = sand.u32 %s241, 1
        %s472 = scalar_lea.sflag [#allocation9], %s471
        %s473 = sand.u32 %s241, 1
        %s474 = smul.addr %s473, 64
        %s475 = scalar_lea.vmem [#allocation8], %s474
        %p476 = pneg %p254
        %p477 = pneg %p251
        %p478 = pneg %p280
        %p479 = pneg %p277
        %s480 = sand.u32 %s267, 1
        %s481 = scalar_lea.sflag [#allocation4], %s480
        %s482 = sand.u32 %s267, 1
        %s483 = smul.addr %s482, 256
        %s484 = scalar_lea.vmem [#allocation10], %s483
        %p485 = pneg %p306
        %p486 = pneg %p303
        %s487 = sand.u32 %s293, 1
        %s488 = scalar_lea.sflag [#allocation12], %s487
        %s489 = sand.u32 %s293, 1
        %s490 = smul.addr %s489, 2
        %s491 = scalar_lea.vmem [#allocation11], %s490
        %s492 = smul.u32 32, %s34
        %p493 = scmp.lt.s32.totalorder %s492, 127
        %s494 = scalar_select %p493, %s492, 127
        %s495 = smul.addr %s494, 4
        %s496 = scalar_lea.vmem %s0, %s495
        %s497 = smul.u32 32, %s34
        %s498 = smul.u32 32, %s34
        %p499 = scmp.lt.s32.totalorder %s498, 127
        %s500 = scalar_select %p499, %s498, 127
        %s501 = smul.addr %s500, 4
        %s502 = scalar_lea.vmem %s8, %s501
        %s503 = smul.u32 32, %s34
        %s504 = smul.u32 8, %s34
        %s505 = smul.u32 32, %s34
        %v507 = vld [vmem:[%s496] sm:$0xf]
        %v508 = vld [vmem:[%s496 + $0x4] sm:$0xf]
        %v509 = vld [vmem:[%s496 + $0x8] sm:$0xf]
        %v510 = vld [vmem:[%s496 + $0xc] sm:$0xf]
        %v511 = vld [vmem:[%s496 + $0x10] sm:$0xf]
        %v512 = vld [vmem:[%s496 + $0x14] sm:$0xf]
        %v513 = vld [vmem:[%s496 + $0x18] sm:$0xf]
        %v514 = vld [vmem:[%s496 + $0x1c] sm:$0xf]
        %v515 = vld [vmem:[%s496 + $0x20] sm:$0xf]
        %v516 = vld [vmem:[%s496 + $0x24] sm:$0xf]
        %v517 = vld [vmem:[%s496 + $0x28] sm:$0xf]
        %v518 = vld [vmem:[%s496 + $0x2c] sm:$0xf]
        %v519 = vld [vmem:[%s496 + $0x30] sm:$0xf]
        %v520 = vld [vmem:[%s496 + $0x34] sm:$0xf]
        %v521 = vld [vmem:[%s496 + $0x38] sm:$0xf]
        %v522 = vld [vmem:[%s496 + $0x3c] sm:$0xf]
        %v523 = vld [vmem:[%s496 + $0x40] sm:$0xf]
        %v524 = vld [vmem:[%s496 + $0x44] sm:$0xf]
        %v525 = vld [vmem:[%s496 + $0x48] sm:$0xf]
        %v526 = vld [vmem:[%s496 + $0x4c] sm:$0xf]
        %v527 = vld [vmem:[%s496 + $0x50] sm:$0xf]
        %v528 = vld [vmem:[%s496 + $0x54] sm:$0xf]
        %v529 = vld [vmem:[%s496 + $0x58] sm:$0xf]
        %v530 = vld [vmem:[%s496 + $0x5c] sm:$0xf]
        %v531 = vld [vmem:[%s496 + $0x60] sm:$0xf]
        %v532 = vld [vmem:[%s496 + $0x64] sm:$0xf]
        %v533 = vld [vmem:[%s496 + $0x68] sm:$0xf]
        %v534 = vld [vmem:[%s496 + $0x6c] sm:$0xf]
        %v535 = vld [vmem:[%s496 + $0x70] sm:$0xf]
        %v536 = vld [vmem:[%s496 + $0x74] sm:$0xf]
        %v537 = vld [vmem:[%s496 + $0x78] sm:$0xf]
        %v538 = vld [vmem:[%s496 + $0x7c] sm:$0xf]
        %v539 = vld [vmem:[#allocation2] sm:$0xff]
        %v540 = vld [vmem:[#allocation2 + $0x8] sm:$0xff]
        %v541 = vld [vmem:[#allocation2 + $0x10] sm:$0xff]
        %v542 = vld [vmem:[#allocation2 + $0x18] sm:$0xff]
        %v543 = vld [vmem:[%s2] sm:$0x3]
        %v545 = vlaneseq
        %v546 = vshrl.u32 %v545, 7
        %v547 = vsub.s32 0, %v546
        %v548 = vrot.slane %v543, %v547
        %v549 = vlaneseq
        %v550 = vshrl.u32 %v549, 7
        %v551 = vsub.s32 1, %v550
        %v552 = vrot.slane %v543, %v551
        %v587 = vunpack.c.l.b16 %v507
        %v588 = vunpack.c.l.b16 %v508
        %v589 = vunpack.c.l.b16 %v509
        %v590 = vunpack.c.l.b16 %v510
        %v591 = vunpack.c.l.b16 %v511
        %v592 = vunpack.c.l.b16 %v512
        %v593 = vunpack.c.l.b16 %v513
        %v594 = vunpack.c.l.b16 %v514
        %v595 = vunpack.c.l.b16 %v515
        %v596 = vunpack.c.l.b16 %v516
        %v597 = vunpack.c.l.b16 %v517
        %v598 = vunpack.c.l.b16 %v518
        %v599 = vunpack.c.l.b16 %v519
        %v600 = vunpack.c.l.b16 %v520
        %v601 = vunpack.c.l.b16 %v521
        %v602 = vunpack.c.l.b16 %v522
        %v603 = vunpack.c.l.b16 %v523
        %v604 = vunpack.c.l.b16 %v524
        %v605 = vunpack.c.l.b16 %v525
        %v606 = vunpack.c.l.b16 %v526
        %v607 = vunpack.c.l.b16 %v527
        %v608 = vunpack.c.l.b16 %v528
        %v609 = vunpack.c.l.b16 %v529
        %v610 = vunpack.c.l.b16 %v530
        %v611 = vunpack.c.l.b16 %v531
        %v612 = vunpack.c.l.b16 %v532
        %v613 = vunpack.c.l.b16 %v533
        %v614 = vunpack.c.l.b16 %v534
        %v615 = vunpack.c.l.b16 %v535
        %v616 = vunpack.c.l.b16 %v536
        %v617 = vunpack.c.l.b16 %v537
        %v618 = vunpack.c.l.b16 %v538
        %v619 = vpack.c.b16 %v588, %v587
        %v620 = vpack.c.b16 %v590, %v589
        %v621 = vpack.c.b16 %v592, %v591
        %v622 = vpack.c.b16 %v594, %v593
        %v623 = vpack.c.b16 %v596, %v595
        %v624 = vpack.c.b16 %v598, %v597
        %v625 = vpack.c.b16 %v600, %v599
        %v626 = vpack.c.b16 %v602, %v601
        %v627 = vpack.c.b16 %v604, %v603
        %v628 = vpack.c.b16 %v606, %v605
        %v629 = vpack.c.b16 %v608, %v607
        %v630 = vpack.c.b16 %v610, %v609
        %v631 = vpack.c.b16 %v612, %v611
        %v632 = vpack.c.b16 %v614, %v613
        %v633 = vpack.c.b16 %v616, %v615
        %v634 = vpack.c.b16 %v618, %v617
        %v639 = vunpack.c.l.b16 %v539
        %v640 = vunpack.c.h.b16 %v539
        %v641 = vunpack.c.l.b16 %v540
        %v642 = vunpack.c.h.b16 %v540
        %v643 = vunpack.c.l.b16 %v541
        %v644 = vunpack.c.h.b16 %v541
        %v645 = vunpack.c.l.b16 %v542
        %v646 = vunpack.c.h.b16 %v542
        %v647 = vpack.c.b16 %v641, %v639
        %v648 = vpack.c.b16 %v642, %v640
        %v649 = vpack.c.b16 %v645, %v643
        %v650 = vpack.c.b16 %v646, %v644
        %vm655 = vcmask 261120
        %v657 = vsel %vm655, %v619, 0
        %v660 = vsel %vm655, %v620, 0
        %v663 = vsel %vm655, %v621, 0
        %v666 = vsel %vm655, %v622, 0
        %v669 = vsel %vm655, %v623, 0
        %v672 = vsel %vm655, %v624, 0
        %v675 = vsel %vm655, %v625, 0
        %v678 = vsel %vm655, %v626, 0
        %v681 = vsel %vm655, %v627, 0
        %v684 = vsel %vm655, %v628, 0
        %v687 = vsel %vm655, %v629, 0
        %v690 = vsel %vm655, %v630, 0
        %v693 = vsel %vm655, %v631, 0
        %v696 = vsel %vm655, %v632, 0
        %v699 = vsel %vm655, %v633, 0
        %v702 = vsel %vm655, %v634, 0
        %704 = vmatprep.subr.bf16.mxu0 0
        %705 = vmatpush1.bf16.msra.mxu0 0
        %706 = vmatprep.subr.bf16.mxu0 0
        %707 = vmatpush1.bf16.msra.mxu0 0
        %708 = vmatprep.subr.bf16.mxu0 0
        %709 = vmatpush1.bf16.msra.mxu0 0
        %710 = vmatprep.subr.bf16.mxu0 0
        %711 = vmatpush1.bf16.msra.mxu0 0
        %712 = vmatprep.subr.bf16.mxu0 0
        %713 = vmatpush1.bf16.msra.mxu0 0
        %714 = vmatprep.subr.bf16.mxu0 0
        %715 = vmatpush1.bf16.msra.mxu0 0
        %716 = vmatprep.subr.bf16.mxu0 %v650
        %717 = vmatpush1.bf16.msra.mxu0 %v649
        %718 = vmatprep.subr.bf16.mxu0 %v648
        %719 = vmatpush1.bf16.msra.mxu0 %v647
        %720 = vmatprep.subr.bf16.mxu0 0
        %721 = vmatpush2.bf16.msra.mxu0 0
        %722 = vmatprep.subr.bf16.mxu0 0
        %723 = vmatpush2.bf16.msra.mxu0 0
        %724 = vmatprep.subr.bf16.mxu0 0
        %725 = vmatpush2.bf16.msra.mxu0 0
        %726 = vmatprep.subr.bf16.mxu0 0
        %727 = vmatpush2.bf16.msra.mxu0 0
        %728 = vmatprep.subr.bf16.mxu0 0
        %729 = vmatpush2.bf16.msra.mxu0 0
        %730 = vmatprep.subr.bf16.mxu0 0
        %731 = vmatpush2.bf16.msra.mxu0 0
        %732 = vmatprep.subr.bf16.mxu0 0
        %733 = vmatpush2.bf16.msra.mxu0 0
        %734 = vmatprep.subr.bf16.mxu0 0
        %735 = vmatpush2.bf16.msra.mxu0 0
        %736 = vmatprep.mubr.bf16.mxu0 0
        %737 = vmatmul.mubr.bf16.gmra.mxu0 %v657
        %v738 = vpop.f32.mrf.mxu0
        %v739 = vadd.f32 %v548, %v738
        %v740 = vpop.f32.mrf.mxu0
        %v741 = vadd.f32 %v552, %v740
        %v742 = vpop.f32.mrf.mxu0
        %v743 = vadd.f32 %v548, %v742
        %v744 = vpop.f32.mrf.mxu0
        %v745 = vadd.f32 %v552, %v744
        %746 = vmatprep.mubr.bf16.mxu0 0
        %747 = vmatmul.mubr.bf16.gmra.mxu0 %v660
        %v748 = vpop.f32.mrf.mxu0
        %v749 = vadd.f32 %v548, %v748
        %v750 = vpop.f32.mrf.mxu0
        %v751 = vadd.f32 %v552, %v750
        %v752 = vpop.f32.mrf.mxu0
        %v753 = vadd.f32 %v548, %v752
        %v754 = vpop.f32.mrf.mxu0
        %v755 = vadd.f32 %v552, %v754
        %756 = vmatprep.mubr.bf16.mxu0 0
        %757 = vmatmul.mubr.bf16.gmra.mxu0 %v663
        %v758 = vpop.f32.mrf.mxu0
        %v759 = vadd.f32 %v548, %v758
        %v760 = vpop.f32.mrf.mxu0
        %v761 = vadd.f32 %v552, %v760
        %v762 = vpop.f32.mrf.mxu0
        %v763 = vadd.f32 %v548, %v762
        %v764 = vpop.f32.mrf.mxu0
        %v765 = vadd.f32 %v552, %v764
        %766 = vmatprep.mubr.bf16.mxu0 0
        %767 = vmatmul.mubr.bf16.gmra.mxu0 %v666
        %v768 = vpop.f32.mrf.mxu0
        %v769 = vadd.f32 %v548, %v768
        %v770 = vpop.f32.mrf.mxu0
        %v771 = vadd.f32 %v552, %v770
        %v772 = vpop.f32.mrf.mxu0
        %v773 = vadd.f32 %v548, %v772
        %v774 = vpop.f32.mrf.mxu0
        %v775 = vadd.f32 %v552, %v774
        %776 = vmatprep.mubr.bf16.mxu0 0
        %777 = vmatmul.mubr.bf16.gmra.mxu0 %v669
        %v778 = vpop.f32.mrf.mxu0
        %v779 = vadd.f32 %v548, %v778
        %v780 = vpop.f32.mrf.mxu0
        %v781 = vadd.f32 %v552, %v780
        %v782 = vpop.f32.mrf.mxu0
        %v783 = vadd.f32 %v548, %v782
        %v784 = vpop.f32.mrf.mxu0
        %v785 = vadd.f32 %v552, %v784
        %786 = vmatprep.mubr.bf16.mxu0 0
        %787 = vmatmul.mubr.bf16.gmra.mxu0 %v672
        %v788 = vpop.f32.mrf.mxu0
        %v789 = vadd.f32 %v548, %v788
        %v790 = vpop.f32.mrf.mxu0
        %v791 = vadd.f32 %v552, %v790
        %v792 = vpop.f32.mrf.mxu0
        %v793 = vadd.f32 %v548, %v792
        %v794 = vpop.f32.mrf.mxu0
        %v795 = vadd.f32 %v552, %v794
        %796 = vmatprep.mubr.bf16.mxu0 0
        %797 = vmatmul.mubr.bf16.gmra.mxu0 %v675
        %v798 = vpop.f32.mrf.mxu0
        %v799 = vadd.f32 %v548, %v798
        %v800 = vpop.f32.mrf.mxu0
        %v801 = vadd.f32 %v552, %v800
        %v802 = vpop.f32.mrf.mxu0
        %v803 = vadd.f32 %v548, %v802
        %v804 = vpop.f32.mrf.mxu0
        %v805 = vadd.f32 %v552, %v804
        %806 = vmatprep.mubr.bf16.mxu0 0
        %807 = vmatmul.mubr.bf16.gmra.mxu0 %v678
        %v808 = vpop.f32.mrf.mxu0
        %v809 = vadd.f32 %v548, %v808
        %v810 = vpop.f32.mrf.mxu0
        %v811 = vadd.f32 %v552, %v810
        %v812 = vpop.f32.mrf.mxu0
        %v813 = vadd.f32 %v548, %v812
        %v814 = vpop.f32.mrf.mxu0
        %v815 = vadd.f32 %v552, %v814
        %816 = vmatprep.mubr.bf16.mxu0 0
        %817 = vmatmul.mubr.bf16.gmra.mxu0 %v681
        %v818 = vpop.f32.mrf.mxu0
        %v819 = vadd.f32 %v548, %v818
        %v820 = vpop.f32.mrf.mxu0
        %v821 = vadd.f32 %v552, %v820
        %v822 = vpop.f32.mrf.mxu0
        %v823 = vadd.f32 %v548, %v822
        %v824 = vpop.f32.mrf.mxu0
        %v825 = vadd.f32 %v552, %v824
        %826 = vmatprep.mubr.bf16.mxu0 0
        %827 = vmatmul.mubr.bf16.gmra.mxu0 %v684
        %v828 = vpop.f32.mrf.mxu0
        %v829 = vadd.f32 %v548, %v828
        %v830 = vpop.f32.mrf.mxu0
        %v831 = vadd.f32 %v552, %v830
        %v832 = vpop.f32.mrf.mxu0
        %v833 = vadd.f32 %v548, %v832
        %v834 = vpop.f32.mrf.mxu0
        %v835 = vadd.f32 %v552, %v834
        %836 = vmatprep.mubr.bf16.mxu0 0
        %837 = vmatmul.mubr.bf16.gmra.mxu0 %v687
        %v838 = vpop.f32.mrf.mxu0
        %v839 = vadd.f32 %v548, %v838
        %v840 = vpop.f32.mrf.mxu0
        %v841 = vadd.f32 %v552, %v840
        %v842 = vpop.f32.mrf.mxu0
        %v843 = vadd.f32 %v548, %v842
        %v844 = vpop.f32.mrf.mxu0
        %v845 = vadd.f32 %v552, %v844
        %846 = vmatprep.mubr.bf16.mxu0 0
        %847 = vmatmul.mubr.bf16.gmra.mxu0 %v690
        %v848 = vpop.f32.mrf.mxu0
        %v849 = vadd.f32 %v548, %v848
        %v850 = vpop.f32.mrf.mxu0
        %v851 = vadd.f32 %v552, %v850
        %v852 = vpop.f32.mrf.mxu0
        %v853 = vadd.f32 %v548, %v852
        %v854 = vpop.f32.mrf.mxu0
        %v855 = vadd.f32 %v552, %v854
        %856 = vmatprep.mubr.bf16.mxu0 0
        %857 = vmatmul.mubr.bf16.gmra.mxu0 %v693
        %v858 = vpop.f32.mrf.mxu0
        %v859 = vadd.f32 %v548, %v858
        %v860 = vpop.f32.mrf.mxu0
        %v861 = vadd.f32 %v552, %v860
        %v862 = vpop.f32.mrf.mxu0
        %v863 = vadd.f32 %v548, %v862
        %v864 = vpop.f32.mrf.mxu0
        %v865 = vadd.f32 %v552, %v864
        %866 = vmatprep.mubr.bf16.mxu0 0
        %867 = vmatmul.mubr.bf16.gmra.mxu0 %v696
        %v868 = vpop.f32.mrf.mxu0
        %v869 = vadd.f32 %v548, %v868
        %v870 = vpop.f32.mrf.mxu0
        %v871 = vadd.f32 %v552, %v870
        %v872 = vpop.f32.mrf.mxu0
        %v873 = vadd.f32 %v548, %v872
        %v874 = vpop.f32.mrf.mxu0
        %v875 = vadd.f32 %v552, %v874
        %876 = vmatprep.mubr.bf16.mxu0 0
        %877 = vmatmul.mubr.bf16.gmra.mxu0 %v699
        %v878 = vpop.f32.mrf.mxu0
        %v879 = vadd.f32 %v548, %v878
        %v880 = vpop.f32.mrf.mxu0
        %v881 = vadd.f32 %v552, %v880
        %v882 = vpop.f32.mrf.mxu0
        %v883 = vadd.f32 %v548, %v882
        %v884 = vpop.f32.mrf.mxu0
        %v885 = vadd.f32 %v552, %v884
        %886 = vmatprep.mubr.bf16.mxu0 0
        %887 = vmatmul.mubr.bf16.gmra.mxu0 %v702
        %v888 = vpop.f32.mrf.mxu0
        %v889 = vadd.f32 %v548, %v888
        %v890 = vpop.f32.mrf.mxu0
        %v891 = vadd.f32 %v552, %v890
        %v892 = vpop.f32.mrf.mxu0
        %v893 = vadd.f32 %v548, %v892
        %v894 = vpop.f32.mrf.mxu0
        %v895 = vadd.f32 %v552, %v894
        %896 = vdwg.mxu0
        %v897 = vmul.f32 %v739, %v739
        %v898 = vmul.f32 %v741, %v741
        %v899 = vmul.f32 %v743, %v743
        %v900 = vmul.f32 %v745, %v745
        %v901 = vmul.f32 %v749, %v749
        %v902 = vmul.f32 %v751, %v751
        %v903 = vmul.f32 %v753, %v753
        %v904 = vmul.f32 %v755, %v755
        %v905 = vmul.f32 %v759, %v759
        %v906 = vmul.f32 %v761, %v761
        %v907 = vmul.f32 %v763, %v763
        %v908 = vmul.f32 %v765, %v765
        %v909 = vmul.f32 %v769, %v769
        %v910 = vmul.f32 %v771, %v771
        %v911 = vmul.f32 %v773, %v773
        %v912 = vmul.f32 %v775, %v775
        %v913 = vmul.f32 %v779, %v779
        %v914 = vmul.f32 %v781, %v781
        %v915 = vmul.f32 %v783, %v783
        %v916 = vmul.f32 %v785, %v785
        %v917 = vmul.f32 %v789, %v789
        %v918 = vmul.f32 %v791, %v791
        %v919 = vmul.f32 %v793, %v793
        %v920 = vmul.f32 %v795, %v795
        %v921 = vmul.f32 %v799, %v799
        %v922 = vmul.f32 %v801, %v801
        %v923 = vmul.f32 %v803, %v803
        %v924 = vmul.f32 %v805, %v805
        %v925 = vmul.f32 %v809, %v809
        %v926 = vmul.f32 %v811, %v811
        %v927 = vmul.f32 %v813, %v813
        %v928 = vmul.f32 %v815, %v815
        %v929 = vmul.f32 %v819, %v819
        %v930 = vmul.f32 %v821, %v821
        %v931 = vmul.f32 %v823, %v823
        %v932 = vmul.f32 %v825, %v825
        %v933 = vmul.f32 %v829, %v829
        %v934 = vmul.f32 %v831, %v831
        %v935 = vmul.f32 %v833, %v833
        %v936 = vmul.f32 %v835, %v835
        %v937 = vmul.f32 %v839, %v839
        %v938 = vmul.f32 %v841, %v841
        %v939 = vmul.f32 %v843, %v843
        %v940 = vmul.f32 %v845, %v845
        %v941 = vmul.f32 %v849, %v849
        %v942 = vmul.f32 %v851, %v851
        %v943 = vmul.f32 %v853, %v853
        %v944 = vmul.f32 %v855, %v855
        %v945 = vmul.f32 %v859, %v859
        %v946 = vmul.f32 %v861, %v861
        %v947 = vmul.f32 %v863, %v863
        %v948 = vmul.f32 %v865, %v865
        %v949 = vmul.f32 %v869, %v869
        %v950 = vmul.f32 %v871, %v871
        %v951 = vmul.f32 %v873, %v873
        %v952 = vmul.f32 %v875, %v875
        %v953 = vmul.f32 %v879, %v879
        %v954 = vmul.f32 %v881, %v881
        %v955 = vmul.f32 %v883, %v883
        %v956 = vmul.f32 %v885, %v885
        %v957 = vmul.f32 %v889, %v889
        %v958 = vmul.f32 %v891, %v891
        %v959 = vmul.f32 %v893, %v893
        %v960 = vmul.f32 %v895, %v895
        %v961 = vpack.c.bf16 %v899, %v897
        %v962 = vpack.c.bf16 %v900, %v898
        %v963 = vpack.c.bf16 %v903, %v901
        %v964 = vpack.c.bf16 %v904, %v902
        %v965 = vpack.c.bf16 %v907, %v905
        %v966 = vpack.c.bf16 %v908, %v906
        %v967 = vpack.c.bf16 %v911, %v909
        %v968 = vpack.c.bf16 %v912, %v910
        %v969 = vpack.c.bf16 %v915, %v913
        %v970 = vpack.c.bf16 %v916, %v914
        %v971 = vpack.c.bf16 %v919, %v917
        %v972 = vpack.c.bf16 %v920, %v918
        %v973 = vpack.c.bf16 %v923, %v921
        %v974 = vpack.c.bf16 %v924, %v922
        %v975 = vpack.c.bf16 %v927, %v925
        %v976 = vpack.c.bf16 %v928, %v926
        %v977 = vpack.c.bf16 %v931, %v929
        %v978 = vpack.c.bf16 %v932, %v930
        %v979 = vpack.c.bf16 %v935, %v933
        %v980 = vpack.c.bf16 %v936, %v934
        %v981 = vpack.c.bf16 %v939, %v937
        %v982 = vpack.c.bf16 %v940, %v938
        %v983 = vpack.c.bf16 %v943, %v941
        %v984 = vpack.c.bf16 %v944, %v942
        %v985 = vpack.c.bf16 %v947, %v945
        %v986 = vpack.c.bf16 %v948, %v946
        %v987 = vpack.c.bf16 %v951, %v949
        %v988 = vpack.c.bf16 %v952, %v950
        %v989 = vpack.c.bf16 %v955, %v953
        %v990 = vpack.c.bf16 %v956, %v954
        %v991 = vpack.c.bf16 %v959, %v957
        %v992 = vpack.c.bf16 %v960, %v958
        %v993 = vld [vmem:[%s3] sm:$0xf]
        %v994 = vld [vmem:[%s3 + $0x4] sm:$0xf]
        %v995 = vld [vmem:[%s3 + $0x8] sm:$0xf]
        %v996 = vld [vmem:[%s3 + $0xc] sm:$0xf]
        %v997 = vld [vmem:[%s3 + $0x10] sm:$0xf]
        %v998 = vld [vmem:[%s3 + $0x14] sm:$0xf]
        %v999 = vld [vmem:[%s3 + $0x18] sm:$0xf]
        %v1000 = vld [vmem:[%s3 + $0x1c] sm:$0xf]
        %v1001 = vld [vmem:[%s3 + $0x20] sm:$0xf]
        %v1002 = vld [vmem:[%s3 + $0x24] sm:$0xf]
        %v1003 = vld [vmem:[%s3 + $0x28] sm:$0xf]
        %v1004 = vld [vmem:[%s3 + $0x2c] sm:$0xf]
        %v1005 = vld [vmem:[%s3 + $0x30] sm:$0xf]
        %v1006 = vld [vmem:[%s3 + $0x34] sm:$0xf]
        %v1007 = vld [vmem:[%s3 + $0x38] sm:$0xf]
        %v1008 = vld [vmem:[%s3 + $0x3c] sm:$0xf]
        %v1009 = vld [vmem:[%s3 + $0x40] sm:$0xf]
        %v1010 = vld [vmem:[%s3 + $0x44] sm:$0xf]
        %v1011 = vld [vmem:[%s3 + $0x48] sm:$0xf]
        %v1012 = vld [vmem:[%s3 + $0x4c] sm:$0xf]
        %v1013 = vld [vmem:[%s3 + $0x50] sm:$0xf]
        %v1014 = vld [vmem:[%s3 + $0x54] sm:$0xf]
        %v1015 = vld [vmem:[%s3 + $0x58] sm:$0xf]
        %v1016 = vld [vmem:[%s3 + $0x5c] sm:$0xf]
        %v1017 = vld [vmem:[%s3 + $0x60] sm:$0xf]
        %v1018 = vld [vmem:[%s3 + $0x64] sm:$0xf]
        %v1019 = vld [vmem:[%s3 + $0x68] sm:$0xf]
        %v1020 = vld [vmem:[%s3 + $0x6c] sm:$0xf]
        %v1021 = vld [vmem:[%s3 + $0x70] sm:$0xf]
        %v1022 = vld [vmem:[%s3 + $0x74] sm:$0xf]
        %v1023 = vld [vmem:[%s3 + $0x78] sm:$0xf]
        %v1024 = vld [vmem:[%s3 + $0x7c] sm:$0xf]
        %v1057 = vunpack.c.l.b16 %v993
        %v1058 = vunpack.c.l.b16 %v994
        %v1059 = vunpack.c.l.b16 %v995
        %v1060 = vunpack.c.l.b16 %v996
        %v1061 = vunpack.c.l.b16 %v997
        %v1062 = vunpack.c.l.b16 %v998
        %v1063 = vunpack.c.l.b16 %v999
        %v1064 = vunpack.c.l.b16 %v1000
        %v1065 = vunpack.c.l.b16 %v1001
        %v1066 = vunpack.c.l.b16 %v1002
        %v1067 = vunpack.c.l.b16 %v1003
        %v1068 = vunpack.c.l.b16 %v1004
        %v1069 = vunpack.c.l.b16 %v1005
        %v1070 = vunpack.c.l.b16 %v1006
        %v1071 = vunpack.c.l.b16 %v1007
        %v1072 = vunpack.c.l.b16 %v1008
        %v1073 = vunpack.c.l.b16 %v1009
        %v1074 = vunpack.c.l.b16 %v1010
        %v1075 = vunpack.c.l.b16 %v1011
        %v1076 = vunpack.c.l.b16 %v1012
        %v1077 = vunpack.c.l.b16 %v1013
        %v1078 = vunpack.c.l.b16 %v1014
        %v1079 = vunpack.c.l.b16 %v1015
        %v1080 = vunpack.c.l.b16 %v1016
        %v1081 = vunpack.c.l.b16 %v1017
        %v1082 = vunpack.c.l.b16 %v1018
        %v1083 = vunpack.c.l.b16 %v1019
        %v1084 = vunpack.c.l.b16 %v1020
        %v1085 = vunpack.c.l.b16 %v1021
        %v1086 = vunpack.c.l.b16 %v1022
        %v1087 = vunpack.c.l.b16 %v1023
        %v1088 = vunpack.c.l.b16 %v1024
        %v1089 = vpack.c.b16 %v1058, %v1057
        %v1090 = vpack.c.b16 %v1060, %v1059
        %v1091 = vpack.c.b16 %v1062, %v1061
        %v1092 = vpack.c.b16 %v1064, %v1063
        %v1093 = vpack.c.b16 %v1066, %v1065
        %v1094 = vpack.c.b16 %v1068, %v1067
        %v1095 = vpack.c.b16 %v1070, %v1069
        %v1096 = vpack.c.b16 %v1072, %v1071
        %v1097 = vpack.c.b16 %v1074, %v1073
        %v1098 = vpack.c.b16 %v1076, %v1075
        %v1099 = vpack.c.b16 %v1078, %v1077
        %v1100 = vpack.c.b16 %v1080, %v1079
        %v1101 = vpack.c.b16 %v1082, %v1081
        %v1102 = vpack.c.b16 %v1084, %v1083
        %v1103 = vpack.c.b16 %v1086, %v1085
        %v1104 = vpack.c.b16 %v1088, %v1087
        %1121 = vmatprep.subr.bf16.mxu0 0
        %1122 = vmatpush1.bf16.msra.mxu0 %v1096
        %1123 = vmatprep.subr.bf16.mxu0 0
        %1124 = vmatpush1.bf16.msra.mxu0 %v1095
        %1125 = vmatprep.subr.bf16.mxu0 0
        %1126 = vmatpush1.bf16.msra.mxu0 %v1094
        %1127 = vmatprep.subr.bf16.mxu0 0
        %1128 = vmatpush1.bf16.msra.mxu0 %v1093
        %1129 = vmatprep.subr.bf16.mxu0 0
        %1130 = vmatpush1.bf16.msra.mxu0 %v1092
        %1131 = vmatprep.subr.bf16.mxu0 0
        %1132 = vmatpush1.bf16.msra.mxu0 %v1091
        %1133 = vmatprep.subr.bf16.mxu0 0
        %1134 = vmatpush1.bf16.msra.mxu0 %v1090
        %1135 = vmatprep.subr.bf16.mxu0 0
        %1136 = vmatpush1.bf16.msra.mxu0 %v1089
        %1137 = vmatprep.subr.bf16.mxu0 0
        %1138 = vmatpush2.bf16.msra.mxu0 %v1104
        %1139 = vmatprep.subr.bf16.mxu0 0
        %1140 = vmatpush2.bf16.msra.mxu0 %v1103
        %1141 = vmatprep.subr.bf16.mxu0 0
        %1142 = vmatpush2.bf16.msra.mxu0 %v1102
        %1143 = vmatprep.subr.bf16.mxu0 0
        %1144 = vmatpush2.bf16.msra.mxu0 %v1101
        %1145 = vmatprep.subr.bf16.mxu0 0
        %1146 = vmatpush2.bf16.msra.mxu0 %v1100
        %1147 = vmatprep.subr.bf16.mxu0 0
        %1148 = vmatpush2.bf16.msra.mxu0 %v1099
        %1149 = vmatprep.subr.bf16.mxu0 0
        %1150 = vmatpush2.bf16.msra.mxu0 %v1098
        %1151 = vmatprep.subr.bf16.mxu0 0
        %1152 = vmatpush2.bf16.msra.mxu0 %v1097
        %1153 = vmatprep.mubr.bf16.mxu0 %v962
        %1154 = vmatmul.mubr.bf16.gmra.mxu0 %v961
        %v1155 = vpop.f32.mrf.mxu0
        %v1156 = vadd.f32 0.0, %v1155
        %v1157 = vpop.f32.mrf.mxu0
        %v1158 = vpop.f32.mrf.mxu0
        %v1159 = vadd.f32 0.0, %v1158
        %v1160 = vpop.f32.mrf.mxu0
        %1161 = vmatprep.mubr.bf16.mxu0 %v964
        %1162 = vmatmul.mubr.bf16.gmra.mxu0 %v963
        %v1163 = vpop.f32.mrf.mxu0
        %v1164 = vadd.f32 0.0, %v1163
        %v1165 = vpop.f32.mrf.mxu0
        %v1166 = vpop.f32.mrf.mxu0
        %v1167 = vadd.f32 0.0, %v1166
        %v1168 = vpop.f32.mrf.mxu0
        %1169 = vmatprep.mubr.bf16.mxu0 %v966
        %1170 = vmatmul.mubr.bf16.gmra.mxu0 %v965
        %v1171 = vpop.f32.mrf.mxu0
        %v1172 = vadd.f32 0.0, %v1171
        %v1173 = vpop.f32.mrf.mxu0
        %v1174 = vpop.f32.mrf.mxu0
        %v1175 = vadd.f32 0.0, %v1174
        %v1176 = vpop.f32.mrf.mxu0
        %1177 = vmatprep.mubr.bf16.mxu0 %v968
        %1178 = vmatmul.mubr.bf16.gmra.mxu0 %v967
        %v1179 = vpop.f32.mrf.mxu0
        %v1180 = vadd.f32 0.0, %v1179
        %v1181 = vpop.f32.mrf.mxu0
        %v1182 = vpop.f32.mrf.mxu0
        %v1183 = vadd.f32 0.0, %v1182
        %v1184 = vpop.f32.mrf.mxu0
        %1185 = vmatprep.mubr.bf16.mxu0 %v970
        %1186 = vmatmul.mubr.bf16.gmra.mxu0 %v969
        %v1187 = vpop.f32.mrf.mxu0
        %v1188 = vadd.f32 0.0, %v1187
        %v1189 = vpop.f32.mrf.mxu0
        %v1190 = vpop.f32.mrf.mxu0
        %v1191 = vadd.f32 0.0, %v1190
        %v1192 = vpop.f32.mrf.mxu0
        %1193 = vmatprep.mubr.bf16.mxu0 %v972
        %1194 = vmatmul.mubr.bf16.gmra.mxu0 %v971
        %v1195 = vpop.f32.mrf.mxu0
        %v1196 = vadd.f32 0.0, %v1195
        %v1197 = vpop.f32.mrf.mxu0
        %v1198 = vpop.f32.mrf.mxu0
        %v1199 = vadd.f32 0.0, %v1198
        %v1200 = vpop.f32.mrf.mxu0
        %1201 = vmatprep.mubr.bf16.mxu0 %v974
        %1202 = vmatmul.mubr.bf16.gmra.mxu0 %v973
        %v1203 = vpop.f32.mrf.mxu0
        %v1204 = vadd.f32 0.0, %v1203
        %v1205 = vpop.f32.mrf.mxu0
        %v1206 = vpop.f32.mrf.mxu0
        %v1207 = vadd.f32 0.0, %v1206
        %v1208 = vpop.f32.mrf.mxu0
        %1209 = vmatprep.mubr.bf16.mxu0 %v976
        %1210 = vmatmul.mubr.bf16.gmra.mxu0 %v975
        %v1211 = vpop.f32.mrf.mxu0
        %v1212 = vadd.f32 0.0, %v1211
        %v1213 = vpop.f32.mrf.mxu0
        %v1214 = vpop.f32.mrf.mxu0
        %v1215 = vadd.f32 0.0, %v1214
        %v1216 = vpop.f32.mrf.mxu0
        %1217 = vmatprep.mubr.bf16.mxu0 %v978
        %1218 = vmatmul.mubr.bf16.gmra.mxu0 %v977
        %v1219 = vpop.f32.mrf.mxu0
        %v1220 = vadd.f32 0.0, %v1219
        %v1221 = vpop.f32.mrf.mxu0
        %v1222 = vpop.f32.mrf.mxu0
        %v1223 = vadd.f32 0.0, %v1222
        %v1224 = vpop.f32.mrf.mxu0
        %1225 = vmatprep.mubr.bf16.mxu0 %v980
        %1226 = vmatmul.mubr.bf16.gmra.mxu0 %v979
        %v1227 = vpop.f32.mrf.mxu0
        %v1228 = vadd.f32 0.0, %v1227
        %v1229 = vpop.f32.mrf.mxu0
        %v1230 = vpop.f32.mrf.mxu0
        %v1231 = vadd.f32 0.0, %v1230
        %v1232 = vpop.f32.mrf.mxu0
        %1233 = vmatprep.mubr.bf16.mxu0 %v982
        %1234 = vmatmul.mubr.bf16.gmra.mxu0 %v981
        %v1235 = vpop.f32.mrf.mxu0
        %v1236 = vadd.f32 0.0, %v1235
        %v1237 = vpop.f32.mrf.mxu0
        %v1238 = vpop.f32.mrf.mxu0
        %v1239 = vadd.f32 0.0, %v1238
        %v1240 = vpop.f32.mrf.mxu0
        %1241 = vmatprep.mubr.bf16.mxu0 %v984
        %1242 = vmatmul.mubr.bf16.gmra.mxu0 %v983
        %v1243 = vpop.f32.mrf.mxu0
        %v1244 = vadd.f32 0.0, %v1243
        %v1245 = vpop.f32.mrf.mxu0
        %v1246 = vpop.f32.mrf.mxu0
        %v1247 = vadd.f32 0.0, %v1246
        %v1248 = vpop.f32.mrf.mxu0
        %1249 = vmatprep.mubr.bf16.mxu0 %v986
        %1250 = vmatmul.mubr.bf16.gmra.mxu0 %v985
        %v1251 = vpop.f32.mrf.mxu0
        %v1252 = vadd.f32 0.0, %v1251
        %v1253 = vpop.f32.mrf.mxu0
        %v1254 = vpop.f32.mrf.mxu0
        %v1255 = vadd.f32 0.0, %v1254
        %v1256 = vpop.f32.mrf.mxu0
        %1257 = vmatprep.mubr.bf16.mxu0 %v988
        %1258 = vmatmul.mubr.bf16.gmra.mxu0 %v987
        %v1259 = vpop.f32.mrf.mxu0
        %v1260 = vadd.f32 0.0, %v1259
        %v1261 = vpop.f32.mrf.mxu0
        %v1262 = vpop.f32.mrf.mxu0
        %v1263 = vadd.f32 0.0, %v1262
        %v1264 = vpop.f32.mrf.mxu0
        %1265 = vmatprep.mubr.bf16.mxu0 %v990
        %1266 = vmatmul.mubr.bf16.gmra.mxu0 %v989
        %v1267 = vpop.f32.mrf.mxu0
        %v1268 = vadd.f32 0.0, %v1267
        %v1269 = vpop.f32.mrf.mxu0
        %v1270 = vpop.f32.mrf.mxu0
        %v1271 = vadd.f32 0.0, %v1270
        %v1272 = vpop.f32.mrf.mxu0
        %1273 = vmatprep.mubr.bf16.mxu0 %v992
        %1274 = vmatmul.mubr.bf16.gmra.mxu0 %v991
        %v1275 = vpop.f32.mrf.mxu0
        %v1276 = vadd.f32 0.0, %v1275
        %v1277 = vpop.f32.mrf.mxu0
        %v1278 = vpop.f32.mrf.mxu0
        %v1279 = vadd.f32 0.0, %v1278
        %v1280 = vpop.f32.mrf.mxu0
        %1281 = vdwg.mxu0
        %v1282 = vmul.f32 %v1156, 0.03125
        %v1283 = vmul.f32 %v1159, 0.03125
        %v1284 = vmul.f32 %v1164, 0.03125
        %v1285 = vmul.f32 %v1167, 0.03125
        %v1286 = vmul.f32 %v1172, 0.03125
        %v1287 = vmul.f32 %v1175, 0.03125
        %v1288 = vmul.f32 %v1180, 0.03125
        %v1289 = vmul.f32 %v1183, 0.03125
        %v1290 = vmul.f32 %v1188, 0.03125
        %v1291 = vmul.f32 %v1191, 0.03125
        %v1292 = vmul.f32 %v1196, 0.03125
        %v1293 = vmul.f32 %v1199, 0.03125
        %v1294 = vmul.f32 %v1204, 0.03125
        %v1295 = vmul.f32 %v1207, 0.03125
        %v1296 = vmul.f32 %v1212, 0.03125
        %v1297 = vmul.f32 %v1215, 0.03125
        %v1298 = vmul.f32 %v1220, 0.03125
        %v1299 = vmul.f32 %v1223, 0.03125
        %v1300 = vmul.f32 %v1228, 0.03125
        %v1301 = vmul.f32 %v1231, 0.03125
        %v1302 = vmul.f32 %v1236, 0.03125
        %v1303 = vmul.f32 %v1239, 0.03125
        %v1304 = vmul.f32 %v1244, 0.03125
        %v1305 = vmul.f32 %v1247, 0.03125
        %v1306 = vmul.f32 %v1252, 0.03125
        %v1307 = vmul.f32 %v1255, 0.03125
        %v1308 = vmul.f32 %v1260, 0.03125
        %v1309 = vmul.f32 %v1263, 0.03125
        %v1310 = vmul.f32 %v1268, 0.03125
        %v1311 = vmul.f32 %v1271, 0.03125
        %v1312 = vmul.f32 %v1276, 0.03125
        %v1313 = vmul.f32 %v1279, 0.03125
        %v1314 = vmax.f32 %v1282, 1e-24
        %v1315 = vmax.f32 %v1283, 1e-24
        %v1316 = vmax.f32 %v1284, 1e-24
        %v1317 = vmax.f32 %v1285, 1e-24
        %v1318 = vmax.f32 %v1286, 1e-24
        %v1319 = vmax.f32 %v1287, 1e-24
        %v1320 = vmax.f32 %v1288, 1e-24
        %v1321 = vmax.f32 %v1289, 1e-24
        %v1322 = vmax.f32 %v1290, 1e-24
        %v1323 = vmax.f32 %v1291, 1e-24
        %v1324 = vmax.f32 %v1292, 1e-24
        %v1325 = vmax.f32 %v1293, 1e-24
        %v1326 = vmax.f32 %v1294, 1e-24
        %v1327 = vmax.f32 %v1295, 1e-24
        %v1328 = vmax.f32 %v1296, 1e-24
        %v1329 = vmax.f32 %v1297, 1e-24
        %v1330 = vmax.f32 %v1298, 1e-24
        %v1331 = vmax.f32 %v1299, 1e-24
        %v1332 = vmax.f32 %v1300, 1e-24
        %v1333 = vmax.f32 %v1301, 1e-24
        %v1334 = vmax.f32 %v1302, 1e-24
        %v1335 = vmax.f32 %v1303, 1e-24
        %v1336 = vmax.f32 %v1304, 1e-24
        %v1337 = vmax.f32 %v1305, 1e-24
        %v1338 = vmax.f32 %v1306, 1e-24
        %v1339 = vmax.f32 %v1307, 1e-24
        %v1340 = vmax.f32 %v1308, 1e-24
        %v1341 = vmax.f32 %v1309, 1e-24
        %v1342 = vmax.f32 %v1310, 1e-24
        %v1343 = vmax.f32 %v1311, 1e-24
        %v1344 = vmax.f32 %v1312, 1e-24
        %v1345 = vmax.f32 %v1313, 1e-24
        %v1346 = vrsqrt.pop %v1314
        %v1347 = vrsqrt.pop %v1315
        %v1348 = vrsqrt.pop %v1316
        %v1349 = vrsqrt.pop %v1317
        %v1350 = vrsqrt.pop %v1318
        %v1351 = vrsqrt.pop %v1319
        %v1352 = vrsqrt.pop %v1320
        %v1353 = vrsqrt.pop %v1321
        %v1354 = vrsqrt.pop %v1322
        %v1355 = vrsqrt.pop %v1323
        %v1356 = vrsqrt.pop %v1324
        %v1357 = vrsqrt.pop %v1325
        %v1358 = vrsqrt.pop %v1326
        %v1359 = vrsqrt.pop %v1327
        %v1360 = vrsqrt.pop %v1328
        %v1361 = vrsqrt.pop %v1329
        %v1362 = vrsqrt.pop %v1330
        %v1363 = vrsqrt.pop %v1331
        %v1364 = vrsqrt.pop %v1332
        %v1365 = vrsqrt.pop %v1333
        %v1366 = vrsqrt.pop %v1334
        %v1367 = vrsqrt.pop %v1335
        %v1368 = vrsqrt.pop %v1336
        %v1369 = vrsqrt.pop %v1337
        %v1370 = vrsqrt.pop %v1338
        %v1371 = vrsqrt.pop %v1339
        %v1372 = vrsqrt.pop %v1340
        %v1373 = vrsqrt.pop %v1341
        %v1374 = vrsqrt.pop %v1342
        %v1375 = vrsqrt.pop %v1343
        %v1376 = vrsqrt.pop %v1344
        %v1377 = vrsqrt.pop %v1345
        %v1378 = vpack.c.bf16 %v1347, %v1346
        %v1379 = vpack.c.bf16 %v1349, %v1348
        %v1380 = vpack.c.bf16 %v1351, %v1350
        %v1381 = vpack.c.bf16 %v1353, %v1352
        %v1382 = vpack.c.bf16 %v1355, %v1354
        %v1383 = vpack.c.bf16 %v1357, %v1356
        %v1384 = vpack.c.bf16 %v1359, %v1358
        %v1385 = vpack.c.bf16 %v1361, %v1360
        %v1386 = vpack.c.bf16 %v1363, %v1362
        %v1387 = vpack.c.bf16 %v1365, %v1364
        %v1388 = vpack.c.bf16 %v1367, %v1366
        %v1389 = vpack.c.bf16 %v1369, %v1368
        %v1390 = vpack.c.bf16 %v1371, %v1370
        %v1391 = vpack.c.bf16 %v1373, %v1372
        %v1392 = vpack.c.bf16 %v1375, %v1374
        %v1393 = vpack.c.bf16 %v1377, %v1376
        %v1394 = vld [vmem:[#allocation5] sm:$0xff]
        %v1395 = vld [vmem:[#allocation5 + $0x8] sm:$0xff]
        %v1396 = vld [vmem:[#allocation5 + $0x10] sm:$0xff]
        %v1397 = vld [vmem:[#allocation5 + $0x18] sm:$0xff]
        %v1398 = vld [vmem:[#allocation5 + $0x20] sm:$0xff]
        %v1399 = vld [vmem:[#allocation5 + $0x28] sm:$0xff]
        %v1400 = vld [vmem:[#allocation5 + $0x30] sm:$0xff]
        %v1401 = vld [vmem:[#allocation5 + $0x38] sm:$0xff]
        %v1402 = vld [vmem:[#allocation5 + $0x40] sm:$0xff]
        %v1403 = vld [vmem:[#allocation5 + $0x48] sm:$0xff]
        %v1404 = vld [vmem:[#allocation5 + $0x50] sm:$0xff]
        %v1405 = vld [vmem:[#allocation5 + $0x58] sm:$0xff]
        %v1406 = vld [vmem:[#allocation5 + $0x60] sm:$0xff]
        %v1407 = vld [vmem:[#allocation5 + $0x68] sm:$0xff]
        %v1408 = vld [vmem:[#allocation5 + $0x70] sm:$0xff]
        %v1409 = vld [vmem:[#allocation5 + $0x78] sm:$0xff]
        %v1426 = vunpack.c.l.b16 %v1394
        %v1427 = vunpack.c.h.b16 %v1394
        %v1428 = vunpack.c.l.b16 %v1395
        %v1429 = vunpack.c.h.b16 %v1395
        %v1430 = vunpack.c.l.b16 %v1396
        %v1431 = vunpack.c.h.b16 %v1396
        %v1432 = vunpack.c.l.b16 %v1397
        %v1433 = vunpack.c.h.b16 %v1397
        %v1434 = vunpack.c.l.b16 %v1398
        %v1435 = vunpack.c.h.b16 %v1398
        %v1436 = vunpack.c.l.b16 %v1399
        %v1437 = vunpack.c.h.b16 %v1399
        %v1438 = vunpack.c.l.b16 %v1400
        %v1439 = vunpack.c.h.b16 %v1400
        %v1440 = vunpack.c.l.b16 %v1401
        %v1441 = vunpack.c.h.b16 %v1401
        %v1442 = vunpack.c.l.b16 %v1402
        %v1443 = vunpack.c.h.b16 %v1402
        %v1444 = vunpack.c.l.b16 %v1403
        %v1445 = vunpack.c.h.b16 %v1403
        %v1446 = vunpack.c.l.b16 %v1404
        %v1447 = vunpack.c.h.b16 %v1404
        %v1448 = vunpack.c.l.b16 %v1405
        %v1449 = vunpack.c.h.b16 %v1405
        %v1450 = vunpack.c.l.b16 %v1406
        %v1451 = vunpack.c.h.b16 %v1406
        %v1452 = vunpack.c.l.b16 %v1407
        %v1453 = vunpack.c.h.b16 %v1407
        %v1454 = vunpack.c.l.b16 %v1408
        %v1455 = vunpack.c.h.b16 %v1408
        %v1456 = vunpack.c.l.b16 %v1409
        %v1457 = vunpack.c.h.b16 %v1409
        %v1458 = vpack.c.b16 %v1428, %v1426
        %v1459 = vpack.c.b16 %v1429, %v1427
        %v1460 = vpack.c.b16 %v1432, %v1430
        %v1461 = vpack.c.b16 %v1433, %v1431
        %v1462 = vpack.c.b16 %v1436, %v1434
        %v1463 = vpack.c.b16 %v1437, %v1435
        %v1464 = vpack.c.b16 %v1440, %v1438
        %v1465 = vpack.c.b16 %v1441, %v1439
        %v1466 = vpack.c.b16 %v1444, %v1442
        %v1467 = vpack.c.b16 %v1445, %v1443
        %v1468 = vpack.c.b16 %v1448, %v1446
        %v1469 = vpack.c.b16 %v1449, %v1447
        %v1470 = vpack.c.b16 %v1452, %v1450
        %v1471 = vpack.c.b16 %v1453, %v1451
        %v1472 = vpack.c.b16 %v1456, %v1454
        %v1473 = vpack.c.b16 %v1457, %v1455
        %1490 = vmatprep.subr.bf16.mxu0 %v1473
        %1491 = vmatpush1.bf16.msra.mxu0 %v1472
        %1492 = vmatprep.subr.bf16.mxu0 %v1471
        %1493 = vmatpush1.bf16.msra.mxu0 %v1470
        %1494 = vmatprep.subr.bf16.mxu0 %v1469
        %1495 = vmatpush1.bf16.msra.mxu0 %v1468
        %1496 = vmatprep.subr.bf16.mxu0 %v1467
        %1497 = vmatpush1.bf16.msra.mxu0 %v1466
        %1498 = vmatprep.subr.bf16.mxu0 %v1465
        %1499 = vmatpush1.bf16.msra.mxu0 %v1464
        %1500 = vmatprep.subr.bf16.mxu0 %v1463
        %1501 = vmatpush1.bf16.msra.mxu0 %v1462
        %1502 = vmatprep.subr.bf16.mxu0 %v1461
        %1503 = vmatpush1.bf16.msra.mxu0 %v1460
        %1504 = vmatprep.subr.bf16.mxu0 %v1459
        %1505 = vmatpush1.bf16.msra.mxu0 %v1458
        %1506 = vmatprep.subr.bf16.mxu0 0
        %1507 = vmatpush2.bf16.msra.mxu0 0
        %1508 = vmatprep.subr.bf16.mxu0 0
        %1509 = vmatpush2.bf16.msra.mxu0 0
        %1510 = vmatprep.subr.bf16.mxu0 0
        %1511 = vmatpush2.bf16.msra.mxu0 0
        %1512 = vmatprep.subr.bf16.mxu0 0
        %1513 = vmatpush2.bf16.msra.mxu0 0
        %1514 = vmatprep.subr.bf16.mxu0 0
        %1515 = vmatpush2.bf16.msra.mxu0 0
        %1516 = vmatprep.subr.bf16.mxu0 0
        %1517 = vmatpush2.bf16.msra.mxu0 0
        %1518 = vmatprep.subr.bf16.mxu0 0
        %1519 = vmatpush2.bf16.msra.mxu0 0
        %1520 = vmatprep.subr.bf16.mxu0 0
        %1521 = vmatpush2.bf16.msra.mxu0 0
        %1522 = vmatprep.mubr.bf16.mxu0 0
        %1523 = vmatmul.mubr.bf16.gmra.mxu0 %v1378
        %v1524 = vpop.f32.mrf.mxu0
        %v1525 = vadd.f32 0.0, %v1524
        %v1526 = vpop.f32.mrf.mxu0
        %v1527 = vadd.f32 0.0, %v1526
        %v1528 = vpop.f32.mrf.mxu0
        %v1529 = vadd.f32 0.0, %v1528
        %v1530 = vpop.f32.mrf.mxu0
        %v1531 = vadd.f32 0.0, %v1530
        %1532 = vmatprep.mubr.bf16.mxu0 0
        %1533 = vmatmul.mubr.bf16.gmra.mxu0 %v1379
        %v1534 = vpop.f32.mrf.mxu0
        %v1535 = vadd.f32 0.0, %v1534
        %v1536 = vpop.f32.mrf.mxu0
        %v1537 = vadd.f32 0.0, %v1536
        %v1538 = vpop.f32.mrf.mxu0
        %v1539 = vadd.f32 0.0, %v1538
        %v1540 = vpop.f32.mrf.mxu0
        %v1541 = vadd.f32 0.0, %v1540
        %1542 = vmatprep.mubr.bf16.mxu0 0
        %1543 = vmatmul.mubr.bf16.gmra.mxu0 %v1380
        %v1544 = vpop.f32.mrf.mxu0
        %v1545 = vadd.f32 0.0, %v1544
        %v1546 = vpop.f32.mrf.mxu0
        %v1547 = vadd.f32 0.0, %v1546
        %v1548 = vpop.f32.mrf.mxu0
        %v1549 = vadd.f32 0.0, %v1548
        %v1550 = vpop.f32.mrf.mxu0
        %v1551 = vadd.f32 0.0, %v1550
        %1552 = vmatprep.mubr.bf16.mxu0 0
        %1553 = vmatmul.mubr.bf16.gmra.mxu0 %v1381
        %v1554 = vpop.f32.mrf.mxu0
        %v1555 = vadd.f32 0.0, %v1554
        %v1556 = vpop.f32.mrf.mxu0
        %v1557 = vadd.f32 0.0, %v1556
        %v1558 = vpop.f32.mrf.mxu0
        %v1559 = vadd.f32 0.0, %v1558
        %v1560 = vpop.f32.mrf.mxu0
        %v1561 = vadd.f32 0.0, %v1560
        %1562 = vmatprep.mubr.bf16.mxu0 0
        %1563 = vmatmul.mubr.bf16.gmra.mxu0 %v1382
        %v1564 = vpop.f32.mrf.mxu0
        %v1565 = vadd.f32 0.0, %v1564
        %v1566 = vpop.f32.mrf.mxu0
        %v1567 = vadd.f32 0.0, %v1566
        %v1568 = vpop.f32.mrf.mxu0
        %v1569 = vadd.f32 0.0, %v1568
        %v1570 = vpop.f32.mrf.mxu0
        %v1571 = vadd.f32 0.0, %v1570
        %1572 = vmatprep.mubr.bf16.mxu0 0
        %1573 = vmatmul.mubr.bf16.gmra.mxu0 %v1383
        %v1574 = vpop.f32.mrf.mxu0
        %v1575 = vadd.f32 0.0, %v1574
        %v1576 = vpop.f32.mrf.mxu0
        %v1577 = vadd.f32 0.0, %v1576
        %v1578 = vpop.f32.mrf.mxu0
        %v1579 = vadd.f32 0.0, %v1578
        %v1580 = vpop.f32.mrf.mxu0
        %v1581 = vadd.f32 0.0, %v1580
        %1582 = vmatprep.mubr.bf16.mxu0 0
        %1583 = vmatmul.mubr.bf16.gmra.mxu0 %v1384
        %v1584 = vpop.f32.mrf.mxu0
        %v1585 = vadd.f32 0.0, %v1584
        %v1586 = vpop.f32.mrf.mxu0
        %v1587 = vadd.f32 0.0, %v1586
        %v1588 = vpop.f32.mrf.mxu0
        %v1589 = vadd.f32 0.0, %v1588
        %v1590 = vpop.f32.mrf.mxu0
        %v1591 = vadd.f32 0.0, %v1590
        %1592 = vmatprep.mubr.bf16.mxu0 0
        %1593 = vmatmul.mubr.bf16.gmra.mxu0 %v1385
        %v1594 = vpop.f32.mrf.mxu0
        %v1595 = vadd.f32 0.0, %v1594
        %v1596 = vpop.f32.mrf.mxu0
        %v1597 = vadd.f32 0.0, %v1596
        %v1598 = vpop.f32.mrf.mxu0
        %v1599 = vadd.f32 0.0, %v1598
        %v1600 = vpop.f32.mrf.mxu0
        %v1601 = vadd.f32 0.0, %v1600
        %1602 = vmatprep.mubr.bf16.mxu0 0
        %1603 = vmatmul.mubr.bf16.gmra.mxu0 %v1386
        %v1604 = vpop.f32.mrf.mxu0
        %v1605 = vadd.f32 0.0, %v1604
        %v1606 = vpop.f32.mrf.mxu0
        %v1607 = vadd.f32 0.0, %v1606
        %v1608 = vpop.f32.mrf.mxu0
        %v1609 = vadd.f32 0.0, %v1608
        %v1610 = vpop.f32.mrf.mxu0
        %v1611 = vadd.f32 0.0, %v1610
        %1612 = vmatprep.mubr.bf16.mxu0 0
        %1613 = vmatmul.mubr.bf16.gmra.mxu0 %v1387
        %v1614 = vpop.f32.mrf.mxu0
        %v1615 = vadd.f32 0.0, %v1614
        %v1616 = vpop.f32.mrf.mxu0
        %v1617 = vadd.f32 0.0, %v1616
        %v1618 = vpop.f32.mrf.mxu0
        %v1619 = vadd.f32 0.0, %v1618
        %v1620 = vpop.f32.mrf.mxu0
        %v1621 = vadd.f32 0.0, %v1620
        %1622 = vmatprep.mubr.bf16.mxu0 0
        %1623 = vmatmul.mubr.bf16.gmra.mxu0 %v1388
        %v1624 = vpop.f32.mrf.mxu0
        %v1625 = vadd.f32 0.0, %v1624
        %v1626 = vpop.f32.mrf.mxu0
        %v1627 = vadd.f32 0.0, %v1626
        %v1628 = vpop.f32.mrf.mxu0
        %v1629 = vadd.f32 0.0, %v1628
        %v1630 = vpop.f32.mrf.mxu0
        %v1631 = vadd.f32 0.0, %v1630
        %1632 = vmatprep.mubr.bf16.mxu0 0
        %1633 = vmatmul.mubr.bf16.gmra.mxu0 %v1389
        %v1634 = vpop.f32.mrf.mxu0
        %v1635 = vadd.f32 0.0, %v1634
        %v1636 = vpop.f32.mrf.mxu0
        %v1637 = vadd.f32 0.0, %v1636
        %v1638 = vpop.f32.mrf.mxu0
        %v1639 = vadd.f32 0.0, %v1638
        %v1640 = vpop.f32.mrf.mxu0
        %v1641 = vadd.f32 0.0, %v1640
        %1642 = vmatprep.mubr.bf16.mxu0 0
        %1643 = vmatmul.mubr.bf16.gmra.mxu0 %v1390
        %v1644 = vpop.f32.mrf.mxu0
        %v1645 = vadd.f32 0.0, %v1644
        %v1646 = vpop.f32.mrf.mxu0
        %v1647 = vadd.f32 0.0, %v1646
        %v1648 = vpop.f32.mrf.mxu0
        %v1649 = vadd.f32 0.0, %v1648
        %v1650 = vpop.f32.mrf.mxu0
        %v1651 = vadd.f32 0.0, %v1650
        %1652 = vmatprep.mubr.bf16.mxu0 0
        %1653 = vmatmul.mubr.bf16.gmra.mxu0 %v1391
        %v1654 = vpop.f32.mrf.mxu0
        %v1655 = vadd.f32 0.0, %v1654
        %v1656 = vpop.f32.mrf.mxu0
        %v1657 = vadd.f32 0.0, %v1656
        %v1658 = vpop.f32.mrf.mxu0
        %v1659 = vadd.f32 0.0, %v1658
        %v1660 = vpop.f32.mrf.mxu0
        %v1661 = vadd.f32 0.0, %v1660
        %1662 = vmatprep.mubr.bf16.mxu0 0
        %1663 = vmatmul.mubr.bf16.gmra.mxu0 %v1392
        %v1664 = vpop.f32.mrf.mxu0
        %v1665 = vadd.f32 0.0, %v1664
        %v1666 = vpop.f32.mrf.mxu0
        %v1667 = vadd.f32 0.0, %v1666
        %v1668 = vpop.f32.mrf.mxu0
        %v1669 = vadd.f32 0.0, %v1668
        %v1670 = vpop.f32.mrf.mxu0
        %v1671 = vadd.f32 0.0, %v1670
        %1672 = vmatprep.mubr.bf16.mxu0 0
        %1673 = vmatmul.mubr.bf16.gmra.mxu0 %v1393
        %v1674 = vpop.f32.mrf.mxu0
        %v1675 = vadd.f32 0.0, %v1674
        %v1676 = vpop.f32.mrf.mxu0
        %v1677 = vadd.f32 0.0, %v1676
        %v1678 = vpop.f32.mrf.mxu0
        %v1679 = vadd.f32 0.0, %v1678
        %v1680 = vpop.f32.mrf.mxu0
        %v1681 = vadd.f32 0.0, %v1680
        %1682 = vdwg.mxu0
        %v1683 = vmul.f32 %v739, %v1525
        %v1684 = vmul.f32 %v741, %v1527
        %v1685 = vmul.f32 %v743, %v1529
        %v1686 = vmul.f32 %v745, %v1531
        %v1687 = vmul.f32 %v749, %v1535
        %v1688 = vmul.f32 %v751, %v1537
        %v1689 = vmul.f32 %v753, %v1539
        %v1690 = vmul.f32 %v755, %v1541
        %v1691 = vmul.f32 %v759, %v1545
        %v1692 = vmul.f32 %v761, %v1547
        %v1693 = vmul.f32 %v763, %v1549
        %v1694 = vmul.f32 %v765, %v1551
        %v1695 = vmul.f32 %v769, %v1555
        %v1696 = vmul.f32 %v771, %v1557
        %v1697 = vmul.f32 %v773, %v1559
        %v1698 = vmul.f32 %v775, %v1561
        %v1699 = vmul.f32 %v779, %v1565
        %v1700 = vmul.f32 %v781, %v1567
        %v1701 = vmul.f32 %v783, %v1569
        %v1702 = vmul.f32 %v785, %v1571
        %v1703 = vmul.f32 %v789, %v1575
        %v1704 = vmul.f32 %v791, %v1577
        %v1705 = vmul.f32 %v793, %v1579
        %v1706 = vmul.f32 %v795, %v1581
        %v1707 = vmul.f32 %v799, %v1585
        %v1708 = vmul.f32 %v801, %v1587
        %v1709 = vmul.f32 %v803, %v1589
        %v1710 = vmul.f32 %v805, %v1591
        %v1711 = vmul.f32 %v809, %v1595
        %v1712 = vmul.f32 %v811, %v1597
        %v1713 = vmul.f32 %v813, %v1599
        %v1714 = vmul.f32 %v815, %v1601
        %v1715 = vmul.f32 %v819, %v1605
        %v1716 = vmul.f32 %v821, %v1607
        %v1717 = vmul.f32 %v823, %v1609
        %v1718 = vmul.f32 %v825, %v1611
        %v1719 = vmul.f32 %v829, %v1615
        %v1720 = vmul.f32 %v831, %v1617
        %v1721 = vmul.f32 %v833, %v1619
        %v1722 = vmul.f32 %v835, %v1621
        %v1723 = vmul.f32 %v839, %v1625
        %v1724 = vmul.f32 %v841, %v1627
        %v1725 = vmul.f32 %v843, %v1629
        %v1726 = vmul.f32 %v845, %v1631
        %v1727 = vmul.f32 %v849, %v1635
        %v1728 = vmul.f32 %v851, %v1637
        %v1729 = vmul.f32 %v853, %v1639
        %v1730 = vmul.f32 %v855, %v1641
        %v1731 = vmul.f32 %v859, %v1645
        %v1732 = vmul.f32 %v861, %v1647
        %v1733 = vmul.f32 %v863, %v1649
        %v1734 = vmul.f32 %v865, %v1651
        %v1735 = vmul.f32 %v869, %v1655
        %v1736 = vmul.f32 %v871, %v1657
        %v1737 = vmul.f32 %v873, %v1659
        %v1738 = vmul.f32 %v875, %v1661
        %v1739 = vmul.f32 %v879, %v1665
        %v1740 = vmul.f32 %v881, %v1667
        %v1741 = vmul.f32 %v883, %v1669
        %v1742 = vmul.f32 %v885, %v1671
        %v1743 = vmul.f32 %v889, %v1675
        %v1744 = vmul.f32 %v891, %v1677
        %v1745 = vmul.f32 %v893, %v1679
        %v1746 = vmul.f32 %v895, %v1681
        %v1747 = vld [vmem:[%s5] sm:$0x3]
        %v1749 = vlaneseq
        %v1750 = vshrl.u32 %v1749, 7
        %v1751 = vsub.s32 0, %v1750
        %v1752 = vrot.slane %v1747, %v1751
        %v1753 = vlaneseq
        %v1754 = vshrl.u32 %v1753, 7
        %v1755 = vsub.s32 1, %v1754
        %v1756 = vrot.slane %v1747, %v1755
        %v1759 = vmul.f32 %v1683, %v1752
        %v1760 = vmul.f32 %v1684, %v1756
        %v1761 = vmul.f32 %v1685, %v1752
        %v1762 = vmul.f32 %v1686, %v1756
        %v1763 = vmul.f32 %v1687, %v1752
        %v1764 = vmul.f32 %v1688, %v1756
        %v1765 = vmul.f32 %v1689, %v1752
        %v1766 = vmul.f32 %v1690, %v1756
        %v1767 = vmul.f32 %v1691, %v1752
        %v1768 = vmul.f32 %v1692, %v1756
        %v1769 = vmul.f32 %v1693, %v1752
        %v1770 = vmul.f32 %v1694, %v1756
        %v1771 = vmul.f32 %v1695, %v1752
        %v1772 = vmul.f32 %v1696, %v1756
        %v1773 = vmul.f32 %v1697, %v1752
        %v1774 = vmul.f32 %v1698, %v1756
        %v1775 = vmul.f32 %v1699, %v1752
        %v1776 = vmul.f32 %v1700, %v1756
        %v1777 = vmul.f32 %v1701, %v1752
        %v1778 = vmul.f32 %v1702, %v1756
        %v1779 = vmul.f32 %v1703, %v1752
        %v1780 = vmul.f32 %v1704, %v1756
        %v1781 = vmul.f32 %v1705, %v1752
        %v1782 = vmul.f32 %v1706, %v1756
        %v1783 = vmul.f32 %v1707, %v1752
        %v1784 = vmul.f32 %v1708, %v1756
        %v1785 = vmul.f32 %v1709, %v1752
        %v1786 = vmul.f32 %v1710, %v1756
        %v1787 = vmul.f32 %v1711, %v1752
        %v1788 = vmul.f32 %v1712, %v1756
        %v1789 = vmul.f32 %v1713, %v1752
        %v1790 = vmul.f32 %v1714, %v1756
        %v1791 = vmul.f32 %v1715, %v1752
        %v1792 = vmul.f32 %v1716, %v1756
        %v1793 = vmul.f32 %v1717, %v1752
        %v1794 = vmul.f32 %v1718, %v1756
        %v1795 = vmul.f32 %v1719, %v1752
        %v1796 = vmul.f32 %v1720, %v1756
        %v1797 = vmul.f32 %v1721, %v1752
        %v1798 = vmul.f32 %v1722, %v1756
        %v1799 = vmul.f32 %v1723, %v1752
        %v1800 = vmul.f32 %v1724, %v1756
        %v1801 = vmul.f32 %v1725, %v1752
        %v1802 = vmul.f32 %v1726, %v1756
        %v1803 = vmul.f32 %v1727, %v1752
        %v1804 = vmul.f32 %v1728, %v1756
        %v1805 = vmul.f32 %v1729, %v1752
        %v1806 = vmul.f32 %v1730, %v1756
        %v1807 = vmul.f32 %v1731, %v1752
        %v1808 = vmul.f32 %v1732, %v1756
        %v1809 = vmul.f32 %v1733, %v1752
        %v1810 = vmul.f32 %v1734, %v1756
        %v1811 = vmul.f32 %v1735, %v1752
        %v1812 = vmul.f32 %v1736, %v1756
        %v1813 = vmul.f32 %v1737, %v1752
        %v1814 = vmul.f32 %v1738, %v1756
        %v1815 = vmul.f32 %v1739, %v1752
        %v1816 = vmul.f32 %v1740, %v1756
        %v1817 = vmul.f32 %v1741, %v1752
        %v1818 = vmul.f32 %v1742, %v1756
        %v1819 = vmul.f32 %v1743, %v1752
        %v1820 = vmul.f32 %v1744, %v1756
        %v1821 = vmul.f32 %v1745, %v1752
        %v1822 = vmul.f32 %v1746, %v1756
        %v1823 = vpack.c.bf16 %v1761, %v1759
        %v1824 = vpack.c.bf16 %v1762, %v1760
        %v1825 = vpack.c.bf16 %v1765, %v1763
        %v1826 = vpack.c.bf16 %v1766, %v1764
        %v1827 = vpack.c.bf16 %v1769, %v1767
        %v1828 = vpack.c.bf16 %v1770, %v1768
        %v1829 = vpack.c.bf16 %v1773, %v1771
        %v1830 = vpack.c.bf16 %v1774, %v1772
        %v1831 = vpack.c.bf16 %v1777, %v1775
        %v1832 = vpack.c.bf16 %v1778, %v1776
        %v1833 = vpack.c.bf16 %v1781, %v1779
        %v1834 = vpack.c.bf16 %v1782, %v1780
        %v1835 = vpack.c.bf16 %v1785, %v1783
        %v1836 = vpack.c.bf16 %v1786, %v1784
        %v1837 = vpack.c.bf16 %v1789, %v1787
        %v1838 = vpack.c.bf16 %v1790, %v1788
        %v1839 = vpack.c.bf16 %v1793, %v1791
        %v1840 = vpack.c.bf16 %v1794, %v1792
        %v1841 = vpack.c.bf16 %v1797, %v1795
        %v1842 = vpack.c.bf16 %v1798, %v1796
        %v1843 = vpack.c.bf16 %v1801, %v1799
        %v1844 = vpack.c.bf16 %v1802, %v1800
        %v1845 = vpack.c.bf16 %v1805, %v1803
        %v1846 = vpack.c.bf16 %v1806, %v1804
        %v1847 = vpack.c.bf16 %v1809, %v1807
        %v1848 = vpack.c.bf16 %v1810, %v1808
        %v1849 = vpack.c.bf16 %v1813, %v1811
        %v1850 = vpack.c.bf16 %v1814, %v1812
        %v1851 = vpack.c.bf16 %v1817, %v1815
        %v1852 = vpack.c.bf16 %v1818, %v1816
        %v1853 = vpack.c.bf16 %v1821, %v1819
        %v1854 = vpack.c.bf16 %v1822, %v1820
        %v1855 = vld [vmem:[#allocation7] sm:$0xf]
        %v1856 = vld [vmem:[#allocation7 + $0x4] sm:$0xf]
        %v1857 = vld [vmem:[#allocation7 + $0x8] sm:$0xf]
        %v1858 = vld [vmem:[#allocation7 + $0xc] sm:$0xf]
        %v1859 = vld [vmem:[#allocation7 + $0x10] sm:$0xf]
        %v1860 = vld [vmem:[#allocation7 + $0x14] sm:$0xf]
        %v1861 = vld [vmem:[#allocation7 + $0x18] sm:$0xf]
        %v1862 = vld [vmem:[#allocation7 + $0x1c] sm:$0xf]
        %v1863 = vld [vmem:[#allocation7 + $0x20] sm:$0xf]
        %v1864 = vld [vmem:[#allocation7 + $0x24] sm:$0xf]
        %v1865 = vld [vmem:[#allocation7 + $0x28] sm:$0xf]
        %v1866 = vld [vmem:[#allocation7 + $0x2c] sm:$0xf]
        %v1867 = vld [vmem:[#allocation7 + $0x30] sm:$0xf]
        %v1868 = vld [vmem:[#allocation7 + $0x34] sm:$0xf]
        %v1869 = vld [vmem:[#allocation7 + $0x38] sm:$0xf]
        %v1870 = vld [vmem:[#allocation7 + $0x3c] sm:$0xf]
        %v1871 = vld [vmem:[#allocation7 + $0x40] sm:$0xf]
        %v1872 = vld [vmem:[#allocation7 + $0x44] sm:$0xf]
        %v1873 = vld [vmem:[#allocation7 + $0x48] sm:$0xf]
        %v1874 = vld [vmem:[#allocation7 + $0x4c] sm:$0xf]
        %v1875 = vld [vmem:[#allocation7 + $0x50] sm:$0xf]
        %v1876 = vld [vmem:[#allocation7 + $0x54] sm:$0xf]
        %v1877 = vld [vmem:[#allocation7 + $0x58] sm:$0xf]
        %v1878 = vld [vmem:[#allocation7 + $0x5c] sm:$0xf]
        %v1879 = vld [vmem:[#allocation7 + $0x60] sm:$0xf]
        %v1880 = vld [vmem:[#allocation7 + $0x64] sm:$0xf]
        %v1881 = vld [vmem:[#allocation7 + $0x68] sm:$0xf]
        %v1882 = vld [vmem:[#allocation7 + $0x6c] sm:$0xf]
        %v1883 = vld [vmem:[#allocation7 + $0x70] sm:$0xf]
        %v1884 = vld [vmem:[#allocation7 + $0x74] sm:$0xf]
        %v1885 = vld [vmem:[#allocation7 + $0x78] sm:$0xf]
        %v1886 = vld [vmem:[#allocation7 + $0x7c] sm:$0xf]
        %v1887 = vld [vmem:[%s7] sm:$0x1]
        %v1889 = vlaneseq
        %v1890 = vshrl.u32 %v1889, 7
        %v1891 = vsub.s32 0, %v1890
        %v1892 = vrot.slane %v1887, %v1891
        %v1926 = vunpack.c.l.b16 %v1855
        %v1927 = vunpack.c.l.b16 %v1856
        %v1928 = vunpack.c.l.b16 %v1857
        %v1929 = vunpack.c.l.b16 %v1858
        %v1930 = vunpack.c.l.b16 %v1859
        %v1931 = vunpack.c.l.b16 %v1860
        %v1932 = vunpack.c.l.b16 %v1861
        %v1933 = vunpack.c.l.b16 %v1862
        %v1934 = vunpack.c.l.b16 %v1863
        %v1935 = vunpack.c.l.b16 %v1864
        %v1936 = vunpack.c.l.b16 %v1865
        %v1937 = vunpack.c.l.b16 %v1866
        %v1938 = vunpack.c.l.b16 %v1867
        %v1939 = vunpack.c.l.b16 %v1868
        %v1940 = vunpack.c.l.b16 %v1869
        %v1941 = vunpack.c.l.b16 %v1870
        %v1942 = vunpack.c.l.b16 %v1871
        %v1943 = vunpack.c.l.b16 %v1872
        %v1944 = vunpack.c.l.b16 %v1873
        %v1945 = vunpack.c.l.b16 %v1874
        %v1946 = vunpack.c.l.b16 %v1875
        %v1947 = vunpack.c.l.b16 %v1876
        %v1948 = vunpack.c.l.b16 %v1877
        %v1949 = vunpack.c.l.b16 %v1878
        %v1950 = vunpack.c.l.b16 %v1879
        %v1951 = vunpack.c.l.b16 %v1880
        %v1952 = vunpack.c.l.b16 %v1881
        %v1953 = vunpack.c.l.b16 %v1882
        %v1954 = vunpack.c.l.b16 %v1883
        %v1955 = vunpack.c.l.b16 %v1884
        %v1956 = vunpack.c.l.b16 %v1885
        %v1957 = vunpack.c.l.b16 %v1886
        %v1958 = vpack.c.b16 %v1927, %v1926
        %v1959 = vpack.c.b16 %v1929, %v1928
        %v1960 = vpack.c.b16 %v1931, %v1930
        %v1961 = vpack.c.b16 %v1933, %v1932
        %v1962 = vpack.c.b16 %v1935, %v1934
        %v1963 = vpack.c.b16 %v1937, %v1936
        %v1964 = vpack.c.b16 %v1939, %v1938
        %v1965 = vpack.c.b16 %v1941, %v1940
        %v1966 = vpack.c.b16 %v1943, %v1942
        %v1967 = vpack.c.b16 %v1945, %v1944
        %v1968 = vpack.c.b16 %v1947, %v1946
        %v1969 = vpack.c.b16 %v1949, %v1948
        %v1970 = vpack.c.b16 %v1951, %v1950
        %v1971 = vpack.c.b16 %v1953, %v1952
        %v1972 = vpack.c.b16 %v1955, %v1954
        %v1973 = vpack.c.b16 %v1957, %v1956
        %1990 = vmatprep.subr.bf16.mxu0 0
        %1991 = vmatpush1.bf16.msra.mxu0 %v1965
        %1992 = vmatprep.subr.bf16.mxu0 0
        %1993 = vmatpush1.bf16.msra.mxu0 %v1964
        %1994 = vmatprep.subr.bf16.mxu0 0
        %1995 = vmatpush1.bf16.msra.mxu0 %v1963
        %1996 = vmatprep.subr.bf16.mxu0 0
        %1997 = vmatpush1.bf16.msra.mxu0 %v1962
        %1998 = vmatprep.subr.bf16.mxu0 0
        %1999 = vmatpush1.bf16.msra.mxu0 %v1961
        %2000 = vmatprep.subr.bf16.mxu0 0
        %2001 = vmatpush1.bf16.msra.mxu0 %v1960
        %2002 = vmatprep.subr.bf16.mxu0 0
        %2003 = vmatpush1.bf16.msra.mxu0 %v1959
        %2004 = vmatprep.subr.bf16.mxu0 0
        %2005 = vmatpush1.bf16.msra.mxu0 %v1958
        %2006 = vmatprep.subr.bf16.mxu0 0
        %2007 = vmatpush2.bf16.msra.mxu0 %v1973
        %2008 = vmatprep.subr.bf16.mxu0 0
        %2009 = vmatpush2.bf16.msra.mxu0 %v1972
        %2010 = vmatprep.subr.bf16.mxu0 0
        %2011 = vmatpush2.bf16.msra.mxu0 %v1971
        %2012 = vmatprep.subr.bf16.mxu0 0
        %2013 = vmatpush2.bf16.msra.mxu0 %v1970
        %2014 = vmatprep.subr.bf16.mxu0 0
        %2015 = vmatpush2.bf16.msra.mxu0 %v1969
        %2016 = vmatprep.subr.bf16.mxu0 0
        %2017 = vmatpush2.bf16.msra.mxu0 %v1968
        %2018 = vmatprep.subr.bf16.mxu0 0
        %2019 = vmatpush2.bf16.msra.mxu0 %v1967
        %2020 = vmatprep.subr.bf16.mxu0 0
        %2021 = vmatpush2.bf16.msra.mxu0 %v1966
        %2022 = vmatprep.mubr.bf16.mxu0 %v1824
        %2023 = vmatmul.mubr.bf16.gmra.mxu0 %v1823
        %v2024 = vpop.f32.mrf.mxu0
        %v2025 = vadd.f32 %v1892, %v2024
        %v2026 = vpop.f32.mrf.mxu0
        %v2027 = vpop.f32.mrf.mxu0
        %v2028 = vadd.f32 %v1892, %v2027
        %v2029 = vpop.f32.mrf.mxu0
        %2030 = vmatprep.mubr.bf16.mxu0 %v1826
        %2031 = vmatmul.mubr.bf16.gmra.mxu0 %v1825
        %v2032 = vpop.f32.mrf.mxu0
        %v2033 = vadd.f32 %v1892, %v2032
        %v2034 = vpop.f32.mrf.mxu0
        %v2035 = vpop.f32.mrf.mxu0
        %v2036 = vadd.f32 %v1892, %v2035
        %v2037 = vpop.f32.mrf.mxu0
        %2038 = vmatprep.mubr.bf16.mxu0 %v1828
        %2039 = vmatmul.mubr.bf16.gmra.mxu0 %v1827
        %v2040 = vpop.f32.mrf.mxu0
        %v2041 = vadd.f32 %v1892, %v2040
        %v2042 = vpop.f32.mrf.mxu0
        %v2043 = vpop.f32.mrf.mxu0
        %v2044 = vadd.f32 %v1892, %v2043
        %v2045 = vpop.f32.mrf.mxu0
        %2046 = vmatprep.mubr.bf16.mxu0 %v1830
        %2047 = vmatmul.mubr.bf16.gmra.mxu0 %v1829
        %v2048 = vpop.f32.mrf.mxu0
        %v2049 = vadd.f32 %v1892, %v2048
        %v2050 = vpop.f32.mrf.mxu0
        %v2051 = vpop.f32.mrf.mxu0
        %v2052 = vadd.f32 %v1892, %v2051
        %v2053 = vpop.f32.mrf.mxu0
        %2054 = vmatprep.mubr.bf16.mxu0 %v1832
        %2055 = vmatmul.mubr.bf16.gmra.mxu0 %v1831
        %v2056 = vpop.f32.mrf.mxu0
        %v2057 = vadd.f32 %v1892, %v2056
        %v2058 = vpop.f32.mrf.mxu0
        %v2059 = vpop.f32.mrf.mxu0
        %v2060 = vadd.f32 %v1892, %v2059
        %v2061 = vpop.f32.mrf.mxu0
        %2062 = vmatprep.mubr.bf16.mxu0 %v1834
        %2063 = vmatmul.mubr.bf16.gmra.mxu0 %v1833
        %v2064 = vpop.f32.mrf.mxu0
        %v2065 = vadd.f32 %v1892, %v2064
        %v2066 = vpop.f32.mrf.mxu0
        %v2067 = vpop.f32.mrf.mxu0
        %v2068 = vadd.f32 %v1892, %v2067
        %v2069 = vpop.f32.mrf.mxu0
        %2070 = vmatprep.mubr.bf16.mxu0 %v1836
        %2071 = vmatmul.mubr.bf16.gmra.mxu0 %v1835
        %v2072 = vpop.f32.mrf.mxu0
        %v2073 = vadd.f32 %v1892, %v2072
        %v2074 = vpop.f32.mrf.mxu0
        %v2075 = vpop.f32.mrf.mxu0
        %v2076 = vadd.f32 %v1892, %v2075
        %v2077 = vpop.f32.mrf.mxu0
        %2078 = vmatprep.mubr.bf16.mxu0 %v1838
        %2079 = vmatmul.mubr.bf16.gmra.mxu0 %v1837
        %v2080 = vpop.f32.mrf.mxu0
        %v2081 = vadd.f32 %v1892, %v2080
        %v2082 = vpop.f32.mrf.mxu0
        %v2083 = vpop.f32.mrf.mxu0
        %v2084 = vadd.f32 %v1892, %v2083
        %v2085 = vpop.f32.mrf.mxu0
        %2086 = vmatprep.mubr.bf16.mxu0 %v1840
        %2087 = vmatmul.mubr.bf16.gmra.mxu0 %v1839
        %v2088 = vpop.f32.mrf.mxu0
        %v2089 = vadd.f32 %v1892, %v2088
        %v2090 = vpop.f32.mrf.mxu0
        %v2091 = vpop.f32.mrf.mxu0
        %v2092 = vadd.f32 %v1892, %v2091
        %v2093 = vpop.f32.mrf.mxu0
        %2094 = vmatprep.mubr.bf16.mxu0 %v1842
        %2095 = vmatmul.mubr.bf16.gmra.mxu0 %v1841
        %v2096 = vpop.f32.mrf.mxu0
        %v2097 = vadd.f32 %v1892, %v2096
        %v2098 = vpop.f32.mrf.mxu0
        %v2099 = vpop.f32.mrf.mxu0
        %v2100 = vadd.f32 %v1892, %v2099
        %v2101 = vpop.f32.mrf.mxu0
        %2102 = vmatprep.mubr.bf16.mxu0 %v1844
        %2103 = vmatmul.mubr.bf16.gmra.mxu0 %v1843
        %v2104 = vpop.f32.mrf.mxu0
        %v2105 = vadd.f32 %v1892, %v2104
        %v2106 = vpop.f32.mrf.mxu0
        %v2107 = vpop.f32.mrf.mxu0
        %v2108 = vadd.f32 %v1892, %v2107
        %v2109 = vpop.f32.mrf.mxu0
        %2110 = vmatprep.mubr.bf16.mxu0 %v1846
        %2111 = vmatmul.mubr.bf16.gmra.mxu0 %v1845
        %v2112 = vpop.f32.mrf.mxu0
        %v2113 = vadd.f32 %v1892, %v2112
        %v2114 = vpop.f32.mrf.mxu0
        %v2115 = vpop.f32.mrf.mxu0
        %v2116 = vadd.f32 %v1892, %v2115
        %v2117 = vpop.f32.mrf.mxu0
        %2118 = vmatprep.mubr.bf16.mxu0 %v1848
        %2119 = vmatmul.mubr.bf16.gmra.mxu0 %v1847
        %v2120 = vpop.f32.mrf.mxu0
        %v2121 = vadd.f32 %v1892, %v2120
        %v2122 = vpop.f32.mrf.mxu0
        %v2123 = vpop.f32.mrf.mxu0
        %v2124 = vadd.f32 %v1892, %v2123
        %v2125 = vpop.f32.mrf.mxu0
        %2126 = vmatprep.mubr.bf16.mxu0 %v1850
        %2127 = vmatmul.mubr.bf16.gmra.mxu0 %v1849
        %v2128 = vpop.f32.mrf.mxu0
        %v2129 = vadd.f32 %v1892, %v2128
        %v2130 = vpop.f32.mrf.mxu0
        %v2131 = vpop.f32.mrf.mxu0
        %v2132 = vadd.f32 %v1892, %v2131
        %v2133 = vpop.f32.mrf.mxu0
        %2134 = vmatprep.mubr.bf16.mxu0 %v1852
        %2135 = vmatmul.mubr.bf16.gmra.mxu0 %v1851
        %v2136 = vpop.f32.mrf.mxu0
        %v2137 = vadd.f32 %v1892, %v2136
        %v2138 = vpop.f32.mrf.mxu0
        %v2139 = vpop.f32.mrf.mxu0
        %v2140 = vadd.f32 %v1892, %v2139
        %v2141 = vpop.f32.mrf.mxu0
        %2142 = vmatprep.mubr.bf16.mxu0 %v1854
        %2143 = vmatmul.mubr.bf16.gmra.mxu0 %v1853
        %v2144 = vpop.f32.mrf.mxu0
        %v2145 = vadd.f32 %v1892, %v2144
        %v2146 = vpop.f32.mrf.mxu0
        %v2147 = vpop.f32.mrf.mxu0
        %v2148 = vadd.f32 %v1892, %v2147
        %v2149 = vpop.f32.mrf.mxu0
        %2150 = vdwg.mxu0
        %2151 = vst [vmem:[%s484] sm:$0xff] %v2025
        %2152 = vst [vmem:[%s484 + $0x8] sm:$0xff] %v2028
        %2153 = vst [vmem:[%s484 + $0x10] sm:$0xff] %v2033
        %2154 = vst [vmem:[%s484 + $0x18] sm:$0xff] %v2036
        %2155 = vst [vmem:[%s484 + $0x20] sm:$0xff] %v2041
        %2156 = vst [vmem:[%s484 + $0x28] sm:$0xff] %v2044
        %2157 = vst [vmem:[%s484 + $0x30] sm:$0xff] %v2049
        %2158 = vst [vmem:[%s484 + $0x38] sm:$0xff] %v2052
        %2159 = vst [vmem:[%s484 + $0x40] sm:$0xff] %v2057
        %2160 = vst [vmem:[%s484 + $0x48] sm:$0xff] %v2060
        %2161 = vst [vmem:[%s484 + $0x50] sm:$0xff] %v2065
        %2162 = vst [vmem:[%s484 + $0x58] sm:$0xff] %v2068
        %2163 = vst [vmem:[%s484 + $0x60] sm:$0xff] %v2073
        %2164 = vst [vmem:[%s484 + $0x68] sm:$0xff] %v2076
        %2165 = vst [vmem:[%s484 + $0x70] sm:$0xff] %v2081
        %2166 = vst [vmem:[%s484 + $0x78] sm:$0xff] %v2084
        %2167 = vst [vmem:[%s484 + $0x80] sm:$0xff] %v2089
        %2168 = vst [vmem:[%s484 + $0x88] sm:$0xff] %v2092
        %2169 = vst [vmem:[%s484 + $0x90] sm:$0xff] %v2097
        %2170 = vst [vmem:[%s484 + $0x98] sm:$0xff] %v2100
        %2171 = vst [vmem:[%s484 + $0xa0] sm:$0xff] %v2105
        %2172 = vst [vmem:[%s484 + $0xa8] sm:$0xff] %v2108
        %2173 = vst [vmem:[%s484 + $0xb0] sm:$0xff] %v2113
        %2174 = vst [vmem:[%s484 + $0xb8] sm:$0xff] %v2116
        %2175 = vst [vmem:[%s484 + $0xc0] sm:$0xff] %v2121
        %2176 = vst [vmem:[%s484 + $0xc8] sm:$0xff] %v2124
        %2177 = vst [vmem:[%s484 + $0xd0] sm:$0xff] %v2129
        %2178 = vst [vmem:[%s484 + $0xd8] sm:$0xff] %v2132
        %2179 = vst [vmem:[%s484 + $0xe0] sm:$0xff] %v2137
        %2180 = vst [vmem:[%s484 + $0xe8] sm:$0xff] %v2140
        %2181 = vst [vmem:[%s484 + $0xf0] sm:$0xff] %v2145
        %2182 = vst [vmem:[%s484 + $0xf8] sm:$0xff] %v2148
        %v2183 = vld [vmem:[%s502] sm:$0xf]
        %v2184 = vld [vmem:[%s502 + $0x4] sm:$0xf]
        %v2185 = vld [vmem:[%s502 + $0x8] sm:$0xf]
        %v2186 = vld [vmem:[%s502 + $0xc] sm:$0xf]
        %v2187 = vld [vmem:[%s502 + $0x10] sm:$0xf]
        %v2188 = vld [vmem:[%s502 + $0x14] sm:$0xf]
        %v2189 = vld [vmem:[%s502 + $0x18] sm:$0xf]
        %v2190 = vld [vmem:[%s502 + $0x1c] sm:$0xf]
        %v2191 = vld [vmem:[%s502 + $0x20] sm:$0xf]
        %v2192 = vld [vmem:[%s502 + $0x24] sm:$0xf]
        %v2193 = vld [vmem:[%s502 + $0x28] sm:$0xf]
        %v2194 = vld [vmem:[%s502 + $0x2c] sm:$0xf]
        %v2195 = vld [vmem:[%s502 + $0x30] sm:$0xf]
        %v2196 = vld [vmem:[%s502 + $0x34] sm:$0xf]
        %v2197 = vld [vmem:[%s502 + $0x38] sm:$0xf]
        %v2198 = vld [vmem:[%s502 + $0x3c] sm:$0xf]
        %v2199 = vld [vmem:[%s502 + $0x40] sm:$0xf]
        %v2200 = vld [vmem:[%s502 + $0x44] sm:$0xf]
        %v2201 = vld [vmem:[%s502 + $0x48] sm:$0xf]
        %v2202 = vld [vmem:[%s502 + $0x4c] sm:$0xf]
        %v2203 = vld [vmem:[%s502 + $0x50] sm:$0xf]
        %v2204 = vld [vmem:[%s502 + $0x54] sm:$0xf]
        %v2205 = vld [vmem:[%s502 + $0x58] sm:$0xf]
        %v2206 = vld [vmem:[%s502 + $0x5c] sm:$0xf]
        %v2207 = vld [vmem:[%s502 + $0x60] sm:$0xf]
        %v2208 = vld [vmem:[%s502 + $0x64] sm:$0xf]
        %v2209 = vld [vmem:[%s502 + $0x68] sm:$0xf]
        %v2210 = vld [vmem:[%s502 + $0x6c] sm:$0xf]
        %v2211 = vld [vmem:[%s502 + $0x70] sm:$0xf]
        %v2212 = vld [vmem:[%s502 + $0x74] sm:$0xf]
        %v2213 = vld [vmem:[%s502 + $0x78] sm:$0xf]
        %v2214 = vld [vmem:[%s502 + $0x7c] sm:$0xf]
        %v2215 = vunpack.c.l.bf16 %v2183
        %v2216 = vunpack.c.l.bf16 %v2184
        %v2217 = vunpack.c.l.bf16 %v2185
        %v2218 = vunpack.c.l.bf16 %v2186
        %v2219 = vunpack.c.l.bf16 %v2187
        %v2220 = vunpack.c.l.bf16 %v2188
        %v2221 = vunpack.c.l.bf16 %v2189
        %v2222 = vunpack.c.l.bf16 %v2190
        %v2223 = vunpack.c.l.bf16 %v2191
        %v2224 = vunpack.c.l.bf16 %v2192
        %v2225 = vunpack.c.l.bf16 %v2193
        %v2226 = vunpack.c.l.bf16 %v2194
        %v2227 = vunpack.c.l.bf16 %v2195
        %v2228 = vunpack.c.l.bf16 %v2196
        %v2229 = vunpack.c.l.bf16 %v2197
        %v2230 = vunpack.c.l.bf16 %v2198
        %v2231 = vunpack.c.l.bf16 %v2199
        %v2232 = vunpack.c.l.bf16 %v2200
        %v2233 = vunpack.c.l.bf16 %v2201
        %v2234 = vunpack.c.l.bf16 %v2202
        %v2235 = vunpack.c.l.bf16 %v2203
        %v2236 = vunpack.c.l.bf16 %v2204
        %v2237 = vunpack.c.l.bf16 %v2205
        %v2238 = vunpack.c.l.bf16 %v2206
        %v2239 = vunpack.c.l.bf16 %v2207
        %v2240 = vunpack.c.l.bf16 %v2208
        %v2241 = vunpack.c.l.bf16 %v2209
        %v2242 = vunpack.c.l.bf16 %v2210
        %v2243 = vunpack.c.l.bf16 %v2211
        %v2244 = vunpack.c.l.bf16 %v2212
        %v2245 = vunpack.c.l.bf16 %v2213
        %v2246 = vunpack.c.l.bf16 %v2214
        %v2247 = vadd.f32 %v2025, %v2215
        %v2248 = vadd.f32 %v2028, %v2216
        %v2249 = vadd.f32 %v2033, %v2217
        %v2250 = vadd.f32 %v2036, %v2218
        %v2251 = vadd.f32 %v2041, %v2219
        %v2252 = vadd.f32 %v2044, %v2220
        %v2253 = vadd.f32 %v2049, %v2221
        %v2254 = vadd.f32 %v2052, %v2222
        %v2255 = vadd.f32 %v2057, %v2223
        %v2256 = vadd.f32 %v2060, %v2224
        %v2257 = vadd.f32 %v2065, %v2225
        %v2258 = vadd.f32 %v2068, %v2226
        %v2259 = vadd.f32 %v2073, %v2227
        %v2260 = vadd.f32 %v2076, %v2228
        %v2261 = vadd.f32 %v2081, %v2229
        %v2262 = vadd.f32 %v2084, %v2230
        %v2263 = vadd.f32 %v2089, %v2231
        %v2264 = vadd.f32 %v2092, %v2232
        %v2265 = vadd.f32 %v2097, %v2233
        %v2266 = vadd.f32 %v2100, %v2234
        %v2267 = vadd.f32 %v2105, %v2235
        %v2268 = vadd.f32 %v2108, %v2236
        %v2269 = vadd.f32 %v2113, %v2237
        %v2270 = vadd.f32 %v2116, %v2238
        %v2271 = vadd.f32 %v2121, %v2239
        %v2272 = vadd.f32 %v2124, %v2240
        %v2273 = vadd.f32 %v2129, %v2241
        %v2274 = vadd.f32 %v2132, %v2242
        %v2275 = vadd.f32 %v2137, %v2243
        %v2276 = vadd.f32 %v2140, %v2244
        %v2277 = vadd.f32 %v2145, %v2245
        %v2278 = vadd.f32 %v2148, %v2246
        %v2279 = vpow.pop %v2247
        %v2280 = vpow.pop %v2248
        %v2281 = vpow.pop %v2249
        %v2282 = vpow.pop %v2250
        %v2283 = vpow.pop %v2251
        %v2284 = vpow.pop %v2252
        %v2285 = vpow.pop %v2253
        %v2286 = vpow.pop %v2254
        %v2287 = vpow.pop %v2255
        %v2288 = vpow.pop %v2256
        %v2289 = vpow.pop %v2257
        %v2290 = vpow.pop %v2258
        %v2291 = vpow.pop %v2259
        %v2292 = vpow.pop %v2260
        %v2293 = vpow.pop %v2261
        %v2294 = vpow.pop %v2262
        %v2295 = vpow.pop %v2263
        %v2296 = vpow.pop %v2264
        %v2297 = vpow.pop %v2265
        %v2298 = vpow.pop %v2266
        %v2299 = vpow.pop %v2267
        %v2300 = vpow.pop %v2268
        %v2301 = vpow.pop %v2269
        %v2302 = vpow.pop %v2270
        %v2303 = vpow.pop %v2271
        %v2304 = vpow.pop %v2272
        %v2305 = vpow.pop %v2273
        %v2306 = vpow.pop %v2274
        %v2307 = vpow.pop %v2275
        %v2308 = vpow.pop %v2276
        %v2309 = vpow.pop %v2277
        %v2310 = vpow.pop %v2278
        %v2311 = vadd.f32 %v2279, %v2280
        %v2312 = vadd.f32 %v2311, %v2281
        %v2313 = vadd.f32 %v2312, %v2282
        %v2314 = vadd.f32 %v2313, %v2283
        %v2315 = vadd.f32 %v2314, %v2284
        %v2316 = vadd.f32 %v2315, %v2285
        %v2317 = vadd.f32 %v2316, %v2286
        %v2318 = vadd.f32 %v2317, %v2287
        %v2319 = vadd.f32 %v2318, %v2288
        %v2320 = vadd.f32 %v2319, %v2289
        %v2321 = vadd.f32 %v2320, %v2290
        %v2322 = vadd.f32 %v2321, %v2291
        %v2323 = vadd.f32 %v2322, %v2292
        %v2324 = vadd.f32 %v2323, %v2293
        %v2325 = vadd.f32 %v2324, %v2294
        %v2326 = vadd.f32 %v2325, %v2295
        %v2327 = vadd.f32 %v2326, %v2296
        %v2328 = vadd.f32 %v2327, %v2297
        %v2329 = vadd.f32 %v2328, %v2298
        %v2330 = vadd.f32 %v2329, %v2299
        %v2331 = vadd.f32 %v2330, %v2300
        %v2332 = vadd.f32 %v2331, %v2301
        %v2333 = vadd.f32 %v2332, %v2302
        %v2334 = vadd.f32 %v2333, %v2303
        %v2335 = vadd.f32 %v2334, %v2304
        %v2336 = vadd.f32 %v2335, %v2305
        %v2337 = vadd.f32 %v2336, %v2306
        %v2338 = vadd.f32 %v2337, %v2307
        %v2339 = vadd.f32 %v2338, %v2308
        %v2340 = vadd.f32 %v2339, %v2309
        %v2341 = vadd.f32 %v2340, %v2310
        %v2342 = vrot.slane %v2341, 4
        %v2343 = vadd.f32 %v2341, %v2342
        %v2344 = vrot.slane %v2343, 2
        %v2345 = vadd.f32 %v2343, %v2344
        %v2346 = vrot.slane %v2345, 1
        %v2347 = vadd.f32 %v2345, %v2346
        %v2348 = vld [vmem:[%s438] sm:$0xff]
        %v2349 = vld [vmem:[%s438 + $0x8] sm:$0xff]
        %v2350 = vld [vmem:[%s438 + $0x10] sm:$0xff]
        %v2351 = vld [vmem:[%s438 + $0x18] sm:$0xff]
        %v2352 = vld [vmem:[%s438 + $0x20] sm:$0xff]
        %v2353 = vld [vmem:[%s438 + $0x28] sm:$0xff]
        %v2354 = vld [vmem:[%s438 + $0x30] sm:$0xff]
        %v2355 = vld [vmem:[%s438 + $0x38] sm:$0xff]
        %v2356 = vunpack.c.0.s8 %v2348
        %v2357 = vunpack.c.1.s8 %v2348
        %v2358 = vunpack.c.2.s8 %v2348
        %v2359 = vunpack.c.3.s8 %v2348
        %v2360 = vunpack.c.0.s8 %v2349
        %v2361 = vunpack.c.1.s8 %v2349
        %v2362 = vunpack.c.2.s8 %v2349
        %v2363 = vunpack.c.3.s8 %v2349
        %v2364 = vunpack.c.0.s8 %v2350
        %v2365 = vunpack.c.1.s8 %v2350
        %v2366 = vunpack.c.2.s8 %v2350
        %v2367 = vunpack.c.3.s8 %v2350
        %v2368 = vunpack.c.0.s8 %v2351
        %v2369 = vunpack.c.1.s8 %v2351
        %v2370 = vunpack.c.2.s8 %v2351
        %v2371 = vunpack.c.3.s8 %v2351
        %v2372 = vunpack.c.0.s8 %v2352
        %v2373 = vunpack.c.1.s8 %v2352
        %v2374 = vunpack.c.2.s8 %v2352
        %v2375 = vunpack.c.3.s8 %v2352
        %v2376 = vunpack.c.0.s8 %v2353
        %v2377 = vunpack.c.1.s8 %v2353
        %v2378 = vunpack.c.2.s8 %v2353
        %v2379 = vunpack.c.3.s8 %v2353
        %v2380 = vunpack.c.0.s8 %v2354
        %v2381 = vunpack.c.1.s8 %v2354
        %v2382 = vunpack.c.2.s8 %v2354
        %v2383 = vunpack.c.3.s8 %v2354
        %v2384 = vunpack.c.0.s8 %v2355
        %v2385 = vunpack.c.1.s8 %v2355
        %v2386 = vunpack.c.2.s8 %v2355
        %v2387 = vunpack.c.3.s8 %v2355
        %v2388 = vcvt.s32.f32 %v2356
        %v2389 = vcvt.s32.f32 %v2357
        %v2390 = vcvt.s32.f32 %v2358
        %v2391 = vcvt.s32.f32 %v2359
        %v2392 = vcvt.s32.f32 %v2360
        %v2393 = vcvt.s32.f32 %v2361
        %v2394 = vcvt.s32.f32 %v2362
        %v2395 = vcvt.s32.f32 %v2363
        %v2396 = vcvt.s32.f32 %v2364
        %v2397 = vcvt.s32.f32 %v2365
        %v2398 = vcvt.s32.f32 %v2366
        %v2399 = vcvt.s32.f32 %v2367
        %v2400 = vcvt.s32.f32 %v2368
        %v2401 = vcvt.s32.f32 %v2369
        %v2402 = vcvt.s32.f32 %v2370
        %v2403 = vcvt.s32.f32 %v2371
        %v2404 = vcvt.s32.f32 %v2372
        %v2405 = vcvt.s32.f32 %v2373
        %v2406 = vcvt.s32.f32 %v2374
        %v2407 = vcvt.s32.f32 %v2375
        %v2408 = vcvt.s32.f32 %v2376
        %v2409 = vcvt.s32.f32 %v2377
        %v2410 = vcvt.s32.f32 %v2378
        %v2411 = vcvt.s32.f32 %v2379
        %v2412 = vcvt.s32.f32 %v2380
        %v2413 = vcvt.s32.f32 %v2381
        %v2414 = vcvt.s32.f32 %v2382
        %v2415 = vcvt.s32.f32 %v2383
        %v2416 = vcvt.s32.f32 %v2384
        %v2417 = vcvt.s32.f32 %v2385
        %v2418 = vcvt.s32.f32 %v2386
        %v2419 = vcvt.s32.f32 %v2387
        %v2420 = vmul.f32 %v2388, %v2025
        %v2421 = vmul.f32 %v2389, %v2028
        %v2422 = vmul.f32 %v2390, %v2033
        %v2423 = vmul.f32 %v2391, %v2036
        %v2424 = vmul.f32 %v2392, %v2041
        %v2425 = vmul.f32 %v2393, %v2044
        %v2426 = vmul.f32 %v2394, %v2049
        %v2427 = vmul.f32 %v2395, %v2052
        %v2428 = vmul.f32 %v2396, %v2057
        %v2429 = vmul.f32 %v2397, %v2060
        %v2430 = vmul.f32 %v2398, %v2065
        %v2431 = vmul.f32 %v2399, %v2068
        %v2432 = vmul.f32 %v2400, %v2073
        %v2433 = vmul.f32 %v2401, %v2076
        %v2434 = vmul.f32 %v2402, %v2081
        %v2435 = vmul.f32 %v2403, %v2084
        %v2436 = vmul.f32 %v2404, %v2089
        %v2437 = vmul.f32 %v2405, %v2092
        %v2438 = vmul.f32 %v2406, %v2097
        %v2439 = vmul.f32 %v2407, %v2100
        %v2440 = vmul.f32 %v2408, %v2105
        %v2441 = vmul.f32 %v2409, %v2108
        %v2442 = vmul.f32 %v2410, %v2113
        %v2443 = vmul.f32 %v2411, %v2116
        %v2444 = vmul.f32 %v2412, %v2121
        %v2445 = vmul.f32 %v2413, %v2124
        %v2446 = vmul.f32 %v2414, %v2129
        %v2447 = vmul.f32 %v2415, %v2132
        %v2448 = vmul.f32 %v2416, %v2137
        %v2449 = vmul.f32 %v2417, %v2140
        %v2450 = vmul.f32 %v2418, %v2145
        %v2451 = vmul.f32 %v2419, %v2148
        %v2452 = vadd.f32 %v2420, %v2421
        %v2453 = vadd.f32 %v2452, %v2422
        %v2454 = vadd.f32 %v2453, %v2423
        %v2455 = vadd.f32 %v2454, %v2424
        %v2456 = vadd.f32 %v2455, %v2425
        %v2457 = vadd.f32 %v2456, %v2426
        %v2458 = vadd.f32 %v2457, %v2427
        %v2459 = vadd.f32 %v2458, %v2428
        %v2460 = vadd.f32 %v2459, %v2429
        %v2461 = vadd.f32 %v2460, %v2430
        %v2462 = vadd.f32 %v2461, %v2431
        %v2463 = vadd.f32 %v2462, %v2432
        %v2464 = vadd.f32 %v2463, %v2433
        %v2465 = vadd.f32 %v2464, %v2434
        %v2466 = vadd.f32 %v2465, %v2435
        %v2467 = vadd.f32 %v2466, %v2436
        %v2468 = vadd.f32 %v2467, %v2437
        %v2469 = vadd.f32 %v2468, %v2438
        %v2470 = vadd.f32 %v2469, %v2439
        %v2471 = vadd.f32 %v2470, %v2440
        %v2472 = vadd.f32 %v2471, %v2441
        %v2473 = vadd.f32 %v2472, %v2442
        %v2474 = vadd.f32 %v2473, %v2443
        %v2475 = vadd.f32 %v2474, %v2444
        %v2476 = vadd.f32 %v2475, %v2445
        %v2477 = vadd.f32 %v2476, %v2446
        %v2478 = vadd.f32 %v2477, %v2447
        %v2479 = vadd.f32 %v2478, %v2448
        %v2480 = vadd.f32 %v2479, %v2449
        %v2481 = vadd.f32 %v2480, %v2450
        %v2482 = vadd.f32 %v2481, %v2451
        %v2483 = vrot.slane %v2482, 4
        %v2484 = vadd.f32 %v2482, %v2483
        %v2485 = vrot.slane %v2484, 2
        %v2486 = vadd.f32 %v2484, %v2485
        %v2487 = vrot.slane %v2486, 1
        %v2488 = vadd.f32 %v2486, %v2487
        %2489 = vst [vmem:[%s491] sm:$0x1] %v2347
        %2490 = vst [vmem:[%s491 + $0x1] sm:$0x1] %v2488
        %s2491 = sand.u32 %s267, 1
        %s2492 = scalar_lea.sflag [#allocation4], %s2491
        %s2493 = sand.u32 %s267, 1
        %s2494 = smul.addr %s2493, 256
        %s2495 = scalar_lea.vmem [#allocation10], %s2494
        %s2496 = sand.u32 %s293, 1
        %s2497 = scalar_lea.sflag [#allocation12], %s2496
        %s2498 = sand.u32 %s293, 1
        %s2499 = smul.addr %s2498, 2
        %s2500 = scalar_lea.vmem [#allocation11], %s2499
        // Predicated region
        $region77: #{tpu_custom_call.1} parent=59 // pred_check
          %p2501 = pneg %p277
        $region78: #{tpu_custom_call.1} parent=59 // pred_check_branch
          %2503 = sbr.rel (%p2501) target = $region80
        $region79: #{tpu_custom_call.1} parent=59 // pred_region
          %s2504 = smul.u32 32, %s34
          %s2506 = ssub.s32 4096, 4096
          %2507 = vsyncadd %s2492, %s2506
          %s2508 = smul.addr %s2504, 128
          %s2509 = scalar_lea.hbm %s10, %s2508
          %s2510 = sshll.u32 %s2495, 4
          %s2511 = int_to_ptr.vmem [resolvable:$true] %s2510
          %2516 = dma.vmem_to_hbm [thread:$0]  %s2511, 4096, %s2509, %s2492, 128, 128, 8
        $region80: #{tpu_custom_call.1} parent=59 // pred_fallthru
          _
        // Predicated region
        $region81: #{tpu_custom_call.1} parent=59 // pred_check
          %p2517 = pneg %p303
        $region82: #{tpu_custom_call.1} parent=59 // pred_check_branch
          %2519 = sbr.rel (%p2517) target = $region84
        $region83: #{tpu_custom_call.1} parent=59 // pred_region
          %s2521 = ssub.s32 32, 32
          %2522 = vsyncadd %s2497, %s2521
          %s2523 = smul.addr %s34, 32
          %s2524 = scalar_lea.hbm %s11, %s2523
          %s2526 = sshll.u32 %s2500, 4
          %s2527 = int_to_ptr.vmem [resolvable:$true] %s2526
          %2529 = dma.vmem_to_hbm [thread:$0]  %s2527, 32, %s2524, %s2497
        $region84: #{tpu_custom_call.1} parent=59 // pred_fallthru
          _
      $region60: #{tpu_custom_call.1} parent=5 // pred_fallthru
        _
      %p2530 = scmp.le.s32.totalorder 2, %s29
      // Predicated region
      $region85: #{tpu_custom_call.1} parent=5 // pred_check
        %p2531 = pneg %p2530
      $region86: #{tpu_custom_call.1} parent=5 // pred_check_branch
        %2533 = sbr.rel (%p2531) target = $region88
      $region87: #{tpu_custom_call.1} parent=5 // pred_region
        %s2534 = ssub.s32 %s29, 2
        // Predicated region
        $region89: #{tpu_custom_call.1} parent=87 // pred_check
          %p2535 = pneg %p283
        $region90: #{tpu_custom_call.1} parent=87 // pred_check_branch
          %2537 = sbr.rel (%p2535) target = $region92
        $region91: #{tpu_custom_call.1} parent=87 // pred_region
          %s2538 = sand.u32 %s268, 1
          %s2539 = scalar_lea.sflag [#allocation4], %s2538
          %s2540 = sand.u32 %s268, 1
          %s2541 = smul.addr %s2540, 256
          %s2542 = scalar_lea.vmem [#allocation10], %s2541
          %2543 = dma.done %s2539, 4096
        $region92: #{tpu_custom_call.1} parent=87 // pred_fallthru
          _
        // Predicated region
        $region93: #{tpu_custom_call.1} parent=87 // pred_check
          %p2544 = pneg %p309
        $region94: #{tpu_custom_call.1} parent=87 // pred_check_branch
          %2546 = sbr.rel (%p2544) target = $region96
        $region95: #{tpu_custom_call.1} parent=87 // pred_region
          %s2547 = sand.u32 %s294, 1
          %s2548 = scalar_lea.sflag [#allocation12], %s2547
          %s2549 = sand.u32 %s294, 1
          %s2550 = smul.addr %s2549, 2
          %s2551 = scalar_lea.vmem [#allocation11], %s2550
          %2552 = dma.done %s2548, 32
        $region96: #{tpu_custom_call.1} parent=87 // pred_fallthru
          _
      $region88: #{tpu_custom_call.1} parent=5 // pred_fallthru
        _
    $region6: #{tpu_custom_call.1} parent=1 // loop_footer
      %s33 = sadd.s32 1, %s29
    $region7: #{tpu_custom_call.1} parent=1 // loop_footer_branch
      %28 = sbr.rel target = $region3
    $region8: #{tpu_custom_call.1} parent=1 // loop_exit
      _
    %2553 = vsyncpa [#allocation3], 1
    %s2554 = scalar_lea.sflag [#allocation3], 1
    %2555 = vsyncpa %s2554, 1
    %2556 = vsyncpa [#allocation6], 1
    %2557 = vsyncpa [#allocation9], 1
    %s2558 = scalar_lea.sflag [#allocation9], 1
    %2559 = vsyncpa %s2558, 1
    %2560 = vsyncpa [#allocation4], 1
    %s2561 = scalar_lea.sflag [#allocation4], 1
    %2562 = vsyncpa %s2561, 1
    %2563 = vsyncpa [#allocation12], 1
    %s2564 = scalar_lea.sflag [#allocation12], 1
    %2565 = vsyncpa %s2564, 1

</llo_original>
